<compile_context>
chip_gen: v6e
topology: v6e:2x2x1
jax: 0.10.0
libtpu: 0.0.40
codegen_flags: <defaults>
</compile_context>

<pallas_src>
import functools

import jax
import jax.numpy as jnp
from jax.experimental import pallas as pl
from jax.experimental.pallas import tpu as pltpu


def _round_up(x, m):
    return (x + m - 1) // m * m


def _cdiv(a, b):
    return (a + b - 1) // b


# --------------------------- parameter preparation ---------------------------
def prepare_moe_params(raw_params, weights_dtype=None):
    """Fuse gate+up ONCE (offline) and optionally cast expert weights (bf16)."""
    wgu = jnp.concatenate([raw_params["wg"], raw_params["wu"]], axis=-1)  # (E,H,2I)
    wd = raw_params["wd"]                                                  # (E,I,H)
    if weights_dtype is not None:
        wgu = wgu.astype(weights_dtype)
        wd = wd.astype(weights_dtype)
    return {"gate": raw_params["gate"], "wgu": wgu, "wd": wd}


# ------------------------- kernel: resident weights --------------------------
def _moe_resident_kernel(rw_ref, x_ref, wgu_ref, wd_ref, o_ref, *,
                         num_experts, inter, moe_weight, use_residual, unroll):
    """One grid step = one sequence tile; all expert weights live in VMEM.

    rw_ref  : SMEM [1, E] f32 routing weights
    x_ref   : VMEM [ts, H] tile of image_features
    wgu_ref : VMEM [E, H, 2I] fused gate|up weights (single resident copy)
    wd_ref  : VMEM [E, I, H] down weights (single resident copy)
    o_ref   : VMEM [ts, H] output tile
    """
    x = x_ref[...]                                             # (ts, H)
    x32 = x.astype(jnp.float32)
    xw = x.astype(wgu_ref.dtype)                               # cast once for MXU

    if use_residual:
        init = jnp.float32(moe_weight) * x32                   # residual seeds acc
    else:
        init = jnp.zeros_like(x32)

    def body(e, acc):
        gu = jnp.dot(xw, wgu_ref[e], preferred_element_type=jnp.float32)  # (ts,2I)
        g = gu[:, :inter]                                      # lane-aligned if I%128==0
        u = gu[:, inter:]
        h = (g * jax.nn.sigmoid(g)) * u                        # SiLU(gate)*up in f32
        d = jnp.dot(h.astype(wd_ref.dtype), wd_ref[e],
                    preferred_element_type=jnp.float32)        # (ts, H)
        return acc + rw_ref[0, e] * d

    acc = jax.lax.fori_loop(0, num_experts, body, init, unroll=unroll)
    o_ref[...] = acc.astype(o_ref.dtype)


# ------------------------- kernel: streaming experts -------------------------
def _moe_stream_kernel(rw_ref, x_ref, wgu_ref, wd_ref, o_ref, acc_ref, *,
                       inter, moe_weight, use_residual):
    """grid = (seq_tiles, experts); one expert's weights streamed per step."""
    e = pl.program_id(1)
    x = x_ref[...]

    @pl.when(e == 0)
    def _():
        if use_residual:
            acc_ref[...] = jnp.float32(moe_weight) * x.astype(jnp.float32)
        else:
            acc_ref[...] = jnp.zeros_like(acc_ref)

    wgu = wgu_ref[0]                                           # (H, 2I)
    gu = jnp.dot(x.astype(wgu.dtype), wgu, preferred_element_type=jnp.float32)
    g = gu[:, :inter]
    u = gu[:, inter:]
    h = (g * jax.nn.sigmoid(g)) * u
    wd = wd_ref[0]                                             # (I, H)
    d = jnp.dot(h.astype(wd.dtype), wd, preferred_element_type=jnp.float32)
    acc_ref[...] = acc_ref[...] + rw_ref[0, e] * d

    @pl.when(e == pl.num_programs(1) - 1)
    def _():
        o_ref[...] = acc_ref[...].astype(o_ref.dtype)


# ---------------------------------- wrapper ----------------------------------
def multilingual_moe_forward(input_embeds, image_features, params, *,
                             moe_weight=1.0, use_moe_residual=True,
                             use_moe=True, seq_tile=None, force_stream=False):
    """Faithful to MultilingualMoE.forward (moe_top_k is unused there)."""
    if not use_moe:
        return image_features

    S, H = image_features.shape
    wgu, wd = params["wgu"], params["wd"]
    E, _, two_I = wgu.shape
    I = two_I // 2

    # ---- gating glue: cls-token attention -> router softmax, explicitly in f32
    # (tiny: 1xT and 1xE matmuls).  mm_vision_select_feature == 'cls_patch'.
    # TODO(synk): could be folded into the kernel prologue to shave a few tiny
    # XLA launches on latency-bound calls; kept as plain-JAX glue here.
    x32 = image_features.astype(jnp.float32)
    emb32 = input_embeds.astype(jnp.float32)
    cls_token = x32[0:1, :]
    scores = (cls_token @ emb32.T) / jnp.sqrt(jnp.float32(H))
    attention_weight = jax.nn.softmax(scores, axis=-1)
    embeds_for_gating = attention_weight @ emb32
    router_logits = embeds_for_gating @ params["gate"].astype(jnp.float32).T
    routing_weights = jax.nn.softmax(router_logits, axis=-1)           # (1, E) f32

    # ---- sizing / path selection -------------------------------------------
    x_dtype = image_features.dtype
    x_item = jnp.dtype(x_dtype).itemsize
    w_item = jnp.dtype(wgu.dtype).itemsize
    weight_bytes = (wgu.size + wd.size) * w_item
    row_align = 16 if x_item < 4 else 8
    unroll = int(min(E, 4))

    # Resident weights only if a single copy comfortably fits (v7x: 64 MiB VMEM).
    use_streaming = bool(force_stream) or weight_bytes > (36 << 20)

    if use_streaming:
        fixed_bytes = 2 * 3 * H * I * w_item          # one expert, double-buffered
        live_experts = 1
    else:
        fixed_bytes = weight_bytes                     # single resident copy
        live_experts = unroll
    # Per-row VMEM: x + out double-buffered (x dtype) + f32 temporaries
    # (x32/acc + gu/h per live expert).
    per_row = 4 * H * x_item + 4 * (2 * H + live_experts * 3 * I)
    budget = 44 << 20                                  # conservative for v7x
    cap = int(max(row_align, min(1024, (budget - fixed_bytes) // max(per_row, 1))))

    if seq_tile is None:
        # Balanced tiles: avoid pathological padding (e.g. S=300 -> 2x150 not 512).
        seq_tile = S if S <= cap else _cdiv(S, _cdiv(S, cap))
    seq_tile = _round_up(min(int(seq_tile), S), row_align)
    num_tiles = _cdiv(S, seq_tile)
    S_pad = num_tiles * seq_tile

    x = image_features
    if S_pad != S:
        x = jnp.pad(x, ((0, S_pad - S), (0, 0)))

    # Always set the scoped-VMEM limit (v5e default is 16 MiB); include the
    # in-kernel f32 temporaries; cap at 50 MiB for v7x headroom.
    vmem_need = fixed_bytes + seq_tile * per_row + (2 << 20)
    vmem_limit = int(min(max(vmem_need, 16 << 20), 50 << 20))

    cost = pl.CostEstimate(
        flops=int(6 * S_pad * H * I * E),
        transcendentals=int(S_pad * I * E),
        bytes_accessed=int(weight_bytes * (num_tiles if use_streaming else 1)
                           + 2 * S_pad * H * x_item + E * 4))

    if use_streaming:
        dims = ("parallel" if num_tiles >= 2 else "arbitrary", "arbitrary")
        kernel = functools.partial(_moe_stream_kernel, inter=I,
                                   moe_weight=float(moe_weight),
                                   use_residual=use_moe_residual)
        out = pl.pallas_call(
            kernel,
            out_shape=jax.ShapeDtypeStruct((S_pad, H), x_dtype),
            grid_spec=pltpu.PrefetchScalarGridSpec(
                num_scalar_prefetch=0,
                grid=(num_tiles, E),
                in_specs=[
                    pl.BlockSpec(memory_space=pltpu.MemorySpace.SMEM),   # routing
                    pl.BlockSpec((seq_tile, H), lambda i, e: (i, 0)),    # x tile
                    pl.BlockSpec((1, H, 2 * I), lambda i, e: (e, 0, 0)),  # gate|up
                    pl.BlockSpec((1, I, H), lambda i, e: (e, 0, 0)),      # down
                ],
                out_specs=pl.BlockSpec((seq_tile, H), lambda i, e: (i, 0)),
                scratch_shapes=[pltpu.VMEM((seq_tile, H), jnp.float32)],
            ),
            compiler_params=pltpu.CompilerParams(
                dimension_semantics=dims, vmem_limit_bytes=vmem_limit),
            cost_estimate=cost,
        )(routing_weights, x, wgu, wd)
    else:
        # With resident weights, megacore "parallel" duplicates the full weight
        # DMA on each TensorCore -> only worth it when clearly compute-bound.
        resident_parallel = num_tiles >= 2 and S_pad >= 1024
        dims = ("parallel" if resident_parallel else "arbitrary",)
        kernel = functools.partial(_moe_resident_kernel, num_experts=E, inter=I,
                                   moe_weight=float(moe_weight),
                                   use_residual=use_moe_residual, unroll=unroll)
        out = pl.pallas_call(
            kernel,
            out_shape=jax.ShapeDtypeStruct((S_pad, H), x_dtype),
            grid_spec=pltpu.PrefetchScalarGridSpec(
                num_scalar_prefetch=0,
                grid=(num_tiles,),
                in_specs=[
                    pl.BlockSpec(memory_space=pltpu.MemorySpace.SMEM),   # routing
                    pl.BlockSpec((seq_tile, H), lambda i: (i, 0)),       # x tile
                    pl.BlockSpec(memory_space=pltpu.MemorySpace.VMEM),   # gate|up resident
                    pl.BlockSpec(memory_space=pltpu.MemorySpace.VMEM),   # down resident
                ],
                out_specs=pl.BlockSpec((seq_tile, H), lambda i: (i, 0)),
            ),
            compiler_params=pltpu.CompilerParams(
                dimension_semantics=dims, vmem_limit_bytes=vmem_limit),
            cost_estimate=cost,
        )(routing_weights, x, wgu, wd)

    return out[:S]


# ----------------------------- pure-JAX reference ----------------------------
def reference_forward(input_embeds, image_features, params, *,
                      moe_weight=1.0, use_moe_residual=True):
    S, H = image_features.shape
    gate = params["gate"].astype(jnp.float32)
    wgu, wd = params["wgu"], params["wd"]
    E = gate.shape[0]
    I = wd.shape[1]

    x32 = image_features.astype(jnp.float32)
    emb32 = input_embeds.astype(jnp.float32)
    cls_token = x32[0:1, :]
    scores = (cls_token @ emb32.T) / jnp.sqrt(jnp.float32(H))
    attention_weight = jax.nn.softmax(scores, axis=-1)
    embeds_for_gating = attention_weight @ emb32
    router_logits = embeds_for_gating @ gate.T
    routing_weights = jax.nn.softmax(router_logits, axis=-1)

    xw = image_features.astype(wgu.dtype)
    outs = []
    for e in range(E):
        gu = jnp.dot(xw, wgu[e], preferred_element_type=jnp.float32)
        g, u = gu[:, :I], gu[:, I:]
        h = jax.nn.silu(g) * u
        d = jnp.dot(h.astype(wd.dtype), wd[e], preferred_element_type=jnp.float32)
        outs.append(d)
    final = jnp.zeros_like(x32)
    for e in range(E):
        final = final + routing_weights[0, e] * outs[e]
    if use_moe_residual:
        final = final + jnp.float32(moe_weight) * x32
    return final.astype(image_features.dtype)


# ---------------------------------- params -----------------------------------
def init_raw_params(key, hidden_size, intermediate_size, num_experts):
    kgate, kg, ku, kd = jax.random.split(key, 4)
    scale = 0.02
    # PyTorch layouts: gate.weight (E, H); gate/up_proj.weight (I, H);
    # down_proj.weight (H, I). Expert matrices are pre-transposed for x @ W.
    gate = scale * jax.random.normal(kgate, (num_experts, hidden_size), jnp.float32)
    wg = scale * jax.random.normal(kg, (num_experts, hidden_size, intermediate_size), jnp.float32)
    wu = scale * jax.random.normal(ku, (num_experts, hidden_size, intermediate_size), jnp.float32)
    wd = scale * jax.random.normal(kd, (num_experts, intermediate_size, hidden_size), jnp.float32)
    return {"gate": gate, "wg": wg, "wu": wu, "wd": wd}


# ----------------------------------- main -------------------------------------
if __name__ == "__main__":
    H = 128          # moe_hidden_size
    I = 256          # moe_intermediate_size
    E = 4            # num_experts
    S = 16           # image_features sequence length (cls + patches)
    T = 8            # input_embeds sequence length
    MOE_WEIGHT = 1.0

    key = jax.random.PRNGKey(0)
    k_params, k_emb, k_img = jax.random.split(key, 3)
    raw_params = init_raw_params(k_params, H, I, E)
    input_embeds = jax.random.normal(k_emb, (T, H), jnp.float32)
    image_features = jax.random.normal(k_img, (S, H), jnp.float32)

    # ---- f32 weights, resident-expert path ----------------------------------
    params_f32 = prepare_moe_params(raw_params)
    out = jax.block_until_ready(multilingual_moe_forward(
        input_embeds, image_features, params_f32,
        moe_weight=MOE_WEIGHT, use_moe_residual=True, use_moe=True))
    ref = reference_forward(input_embeds, image_features, params_f32,
                            moe_weight=MOE_WEIGHT, use_moe_residual=True)
    assert out.shape == (S, H) and out.dtype == image_features.dtype
    assert jnp.allclose(out, ref, rtol=1e-5, atol=1e-5), \
        f"max abs err {jnp.max(jnp.abs(out - ref))}"

    # ---- bf16 weights (half weight DMA / full MXU rate), resident path -------
    params_bf16 = prepare_moe_params(raw_params, weights_dtype=jnp.bfloat16)
    out_bf = jax.block_until_ready(multilingual_moe_forward(
        input_embeds, image_features, params_bf16,
        moe_weight=MOE_WEIGHT, use_moe_residual=True, use_moe=True))
    ref_bf = reference_forward(input_embeds, image_features, params_bf16,
                               moe_weight=MOE_WEIGHT, use_moe_residual=True)
    assert jnp.allclose(out_bf, ref_bf, rtol=5e-3, atol=5e-3), \
        f"max abs err {jnp.max(jnp.abs(out_bf - ref_bf))}"

    # ---- ragged S (padding + slice back) -------------------------------------
    S2 = 13
    image_features2 = jax.random.normal(jax.random.PRNGKey(7), (S2, H), jnp.float32)
    out2 = jax.block_until_ready(multilingual_moe_forward(
        input_embeds, image_features2, params_f32,
        moe_weight=MOE_WEIGHT, use_moe_residual=True, use_moe=True))
    ref2 = reference_forward(input_embeds, image_features2, params_f32,
                             moe_weight=MOE_WEIGHT, use_moe_residual=True)
    assert out2.shape == (S2, H)
    assert jnp.allclose(out2, ref2, rtol=1e-5, atol=1e-5), \
        f"max abs err {jnp.max(jnp.abs(out2 - ref2))}"

    # ---- streaming-expert fallback (v7x path), forced at small shapes --------
    out3 = jax.block_until_ready(multilingual_moe_forward(
        input_embeds, image_features, params_f32,
        moe_weight=MOE_WEIGHT, use_moe_residual=True, use_moe=True,
        force_stream=True))
    assert jnp.allclose(out3, ref, rtol=1e-5, atol=1e-5), \
        f"max abs err {jnp.max(jnp.abs(out3 - ref))}"

    # TODO(synk): moe_top_k is stored by the module but never used in forward;
    # it is intentionally not implemented here.
    print("KERNEL_OK")
</pallas_src>

<mosaic_0001>
module attributes {stable_mosaic.version = 11 : i64} {
  func.func @_moe_resident_kernel(%arg0: i32, %arg1: memref<1x4xf32, #tpu.memory_space<smem>>, %arg2: memref<16x128xf32, #tpu.memory_space<vmem>>, %arg3: memref<4x128x512xf32, #tpu.memory_space<vmem>>, %arg4: memref<4x256x128xf32, #tpu.memory_space<vmem>>, %arg5: memref<16x128xf32, #tpu.memory_space<vmem>>) attributes {dimension_semantics = [#tpu.dimension_semantics<arbitrary>], iteration_bounds = array<i64: 1>, scalar_prefetch = 0 : i64, scratch_operands = 0 : i64, tpu.core_type = #tpu.core_type<tc>, window_params = [{transform_indices = @transform_0, window_bounds = array<i64: 1, 4>}, {transform_indices = @transform_1, window_bounds = array<i64: 16, 128>}, {pipeline_mode = #tpu.pipeline_mode<synchronous>, transform_indices = @transform_2, window_bounds = array<i64: 4, 128, 512>}, {pipeline_mode = #tpu.pipeline_mode<synchronous>, transform_indices = @transform_3, window_bounds = array<i64: 4, 256, 128>}, {transform_indices = @transform_4, window_bounds = array<i64: 16, 128>}]} {
    %c0 = arith.constant 0 : index
    %c0_0 = arith.constant 0 : index
    %0 = vector.load %arg2[%c0, %c0_0] : memref<16x128xf32, #tpu.memory_space<vmem>>, vector<16x128xf32>
    %cst = arith.constant 1.000000e+00 : f32
    %1 = vector.broadcast %cst : f32 to vector<16x128xf32>
    %2 = arith.mulf %1, %0 : vector<16x128xf32>
    %c0_i32 = arith.constant 0 : i32
    %3 = arith.index_cast %c0_i32 : i32 to index
    %c0_1 = arith.constant 0 : index
    %c0_2 = arith.constant 0 : index
    %4 = vector.load %arg3[%3, %c0_1, %c0_2] : memref<4x128x512xf32, #tpu.memory_space<vmem>>, vector<1x128x512xf32>
    %5 = vector.shape_cast %4 : vector<1x128x512xf32> to vector<128x512xf32>
    %cst_3 = arith.constant dense<0.000000e+00> : vector<16x512xf32>
    %6 = tpu.matmul %0, %5, %cst_3 {dimension_numbers = #tpu.dot_dimension_numbers<[1], [0], [0], [1], [0, 0, 1, 1], [], []>} : vector<16x128xf32>, vector<128x512xf32>, vector<16x512xf32> -> vector<16x512xf32>
    %7 = vector.extract_strided_slice %6 {offsets = [0, 0], sizes = [16, 256], strides = [1, 1]} : vector<16x512xf32> to vector<16x256xf32>
    %8 = vector.extract_strided_slice %6 {offsets = [0, 256], sizes = [16, 256], strides = [1, 1]} : vector<16x512xf32> to vector<16x256xf32>
    %9 = arith.negf %7 : vector<16x256xf32>
    %10 = math.exp %9 : vector<16x256xf32>
    %cst_4 = arith.constant 1.000000e+00 : f32
    %11 = vector.broadcast %cst_4 : f32 to vector<16x256xf32>
    %12 = arith.addf %11, %10 : vector<16x256xf32>
    %13 = arith.divf %11, %12 : vector<16x256xf32>
    %14 = arith.mulf %7, %13 : vector<16x256xf32>
    %15 = arith.mulf %14, %8 : vector<16x256xf32>
    %16 = arith.index_cast %c0_i32 : i32 to index
    %c0_5 = arith.constant 0 : index
    %c0_6 = arith.constant 0 : index
    %17 = vector.load %arg4[%16, %c0_5, %c0_6] : memref<4x256x128xf32, #tpu.memory_space<vmem>>, vector<1x256x128xf32>
    %18 = vector.shape_cast %17 : vector<1x256x128xf32> to vector<256x128xf32>
    %cst_7 = arith.constant dense<0.000000e+00> : vector<16x128xf32>
    %19 = tpu.matmul %15, %18, %cst_7 {dimension_numbers = #tpu.dot_dimension_numbers<[1], [0], [0], [1], [0, 0, 1, 1], [], []>} : vector<16x256xf32>, vector<256x128xf32>, vector<16x128xf32> -> vector<16x128xf32>
    %c0_8 = arith.constant 0 : index
    %20 = arith.index_cast %c0_i32 : i32 to index
    %21 = memref.load %arg1[%c0_8, %20] : memref<1x4xf32, #tpu.memory_space<smem>>
    %22 = vector.broadcast %21 : f32 to vector<16x128xf32>
    %23 = arith.mulf %22, %19 : vector<16x128xf32>
    %24 = arith.addf %2, %23 : vector<16x128xf32>
    %c1_i32 = arith.constant 1 : i32
    %25 = arith.index_cast %c1_i32 : i32 to index
    %c0_9 = arith.constant 0 : index
    %c0_10 = arith.constant 0 : index
    %26 = vector.load %arg3[%25, %c0_9, %c0_10] : memref<4x128x512xf32, #tpu.memory_space<vmem>>, vector<1x128x512xf32>
    %27 = vector.shape_cast %26 : vector<1x128x512xf32> to vector<128x512xf32>
    %cst_11 = arith.constant dense<0.000000e+00> : vector<16x512xf32>
    %28 = tpu.matmul %0, %27, %cst_11 {dimension_numbers = #tpu.dot_dimension_numbers<[1], [0], [0], [1], [0, 0, 1, 1], [], []>} : vector<16x128xf32>, vector<128x512xf32>, vector<16x512xf32> -> vector<16x512xf32>
    %29 = vector.extract_strided_slice %28 {offsets = [0, 0], sizes = [16, 256], strides = [1, 1]} : vector<16x512xf32> to vector<16x256xf32>
    %30 = vector.extract_strided_slice %28 {offsets = [0, 256], sizes = [16, 256], strides = [1, 1]} : vector<16x512xf32> to vector<16x256xf32>
    %31 = arith.negf %29 : vector<16x256xf32>
    %32 = math.exp %31 : vector<16x256xf32>
    %cst_12 = arith.constant 1.000000e+00 : f32
    %33 = vector.broadcast %cst_12 : f32 to vector<16x256xf32>
    %34 = arith.addf %33, %32 : vector<16x256xf32>
    %35 = arith.divf %33, %34 : vector<16x256xf32>
    %36 = arith.mulf %29, %35 : vector<16x256xf32>
    %37 = arith.mulf %36, %30 : vector<16x256xf32>
    %38 = arith.index_cast %c1_i32 : i32 to index
    %c0_13 = arith.constant 0 : index
    %c0_14 = arith.constant 0 : index
    %39 = vector.load %arg4[%38, %c0_13, %c0_14] : memref<4x256x128xf32, #tpu.memory_space<vmem>>, vector<1x256x128xf32>
    %40 = vector.shape_cast %39 : vector<1x256x128xf32> to vector<256x128xf32>
    %cst_15 = arith.constant dense<0.000000e+00> : vector<16x128xf32>
    %41 = tpu.matmul %37, %40, %cst_15 {dimension_numbers = #tpu.dot_dimension_numbers<[1], [0], [0], [1], [0, 0, 1, 1], [], []>} : vector<16x256xf32>, vector<256x128xf32>, vector<16x128xf32> -> vector<16x128xf32>
    %c0_16 = arith.constant 0 : index
    %42 = arith.index_cast %c1_i32 : i32 to index
    %43 = memref.load %arg1[%c0_16, %42] : memref<1x4xf32, #tpu.memory_space<smem>>
    %44 = vector.broadcast %43 : f32 to vector<16x128xf32>
    %45 = arith.mulf %44, %41 : vector<16x128xf32>
    %46 = arith.addf %24, %45 : vector<16x128xf32>
    %c2_i32 = arith.constant 2 : i32
    %47 = arith.index_cast %c2_i32 : i32 to index
    %c0_17 = arith.constant 0 : index
    %c0_18 = arith.constant 0 : index
    %48 = vector.load %arg3[%47, %c0_17, %c0_18] : memref<4x128x512xf32, #tpu.memory_space<vmem>>, vector<1x128x512xf32>
    %49 = vector.shape_cast %48 : vector<1x128x512xf32> to vector<128x512xf32>
    %cst_19 = arith.constant dense<0.000000e+00> : vector<16x512xf32>
    %50 = tpu.matmul %0, %49, %cst_19 {dimension_numbers = #tpu.dot_dimension_numbers<[1], [0], [0], [1], [0, 0, 1, 1], [], []>} : vector<16x128xf32>, vector<128x512xf32>, vector<16x512xf32> -> vector<16x512xf32>
    %51 = vector.extract_strided_slice %50 {offsets = [0, 0], sizes = [16, 256], strides = [1, 1]} : vector<16x512xf32> to vector<16x256xf32>
    %52 = vector.extract_strided_slice %50 {offsets = [0, 256], sizes = [16, 256], strides = [1, 1]} : vector<16x512xf32> to vector<16x256xf32>
    %53 = arith.negf %51 : vector<16x256xf32>
    %54 = math.exp %53 : vector<16x256xf32>
    %cst_20 = arith.constant 1.000000e+00 : f32
    %55 = vector.broadcast %cst_20 : f32 to vector<16x256xf32>
    %56 = arith.addf %55, %54 : vector<16x256xf32>
    %57 = arith.divf %55, %56 : vector<16x256xf32>
    %58 = arith.mulf %51, %57 : vector<16x256xf32>
    %59 = arith.mulf %58, %52 : vector<16x256xf32>
    %60 = arith.index_cast %c2_i32 : i32 to index
    %c0_21 = arith.constant 0 : index
    %c0_22 = arith.constant 0 : index
    %61 = vector.load %arg4[%60, %c0_21, %c0_22] : memref<4x256x128xf32, #tpu.memory_space<vmem>>, vector<1x256x128xf32>
    %62 = vector.shape_cast %61 : vector<1x256x128xf32> to vector<256x128xf32>
    %cst_23 = arith.constant dense<0.000000e+00> : vector<16x128xf32>
    %63 = tpu.matmul %59, %62, %cst_23 {dimension_numbers = #tpu.dot_dimension_numbers<[1], [0], [0], [1], [0, 0, 1, 1], [], []>} : vector<16x256xf32>, vector<256x128xf32>, vector<16x128xf32> -> vector<16x128xf32>
    %c0_24 = arith.constant 0 : index
    %64 = arith.index_cast %c2_i32 : i32 to index
    %65 = memref.load %arg1[%c0_24, %64] : memref<1x4xf32, #tpu.memory_space<smem>>
    %66 = vector.broadcast %65 : f32 to vector<16x128xf32>
    %67 = arith.mulf %66, %63 : vector<16x128xf32>
    %68 = arith.addf %46, %67 : vector<16x128xf32>
    %c3_i32 = arith.constant 3 : i32
    %69 = arith.index_cast %c3_i32 : i32 to index
    %c0_25 = arith.constant 0 : index
    %c0_26 = arith.constant 0 : index
    %70 = vector.load %arg3[%69, %c0_25, %c0_26] : memref<4x128x512xf32, #tpu.memory_space<vmem>>, vector<1x128x512xf32>
    %71 = vector.shape_cast %70 : vector<1x128x512xf32> to vector<128x512xf32>
    %cst_27 = arith.constant dense<0.000000e+00> : vector<16x512xf32>
    %72 = tpu.matmul %0, %71, %cst_27 {dimension_numbers = #tpu.dot_dimension_numbers<[1], [0], [0], [1], [0, 0, 1, 1], [], []>} : vector<16x128xf32>, vector<128x512xf32>, vector<16x512xf32> -> vector<16x512xf32>
    %73 = vector.extract_strided_slice %72 {offsets = [0, 0], sizes = [16, 256], strides = [1, 1]} : vector<16x512xf32> to vector<16x256xf32>
    %74 = vector.extract_strided_slice %72 {offsets = [0, 256], sizes = [16, 256], strides = [1, 1]} : vector<16x512xf32> to vector<16x256xf32>
    %75 = arith.negf %73 : vector<16x256xf32>
    %76 = math.exp %75 : vector<16x256xf32>
    %cst_28 = arith.constant 1.000000e+00 : f32
    %77 = vector.broadcast %cst_28 : f32 to vector<16x256xf32>
    %78 = arith.addf %77, %76 : vector<16x256xf32>
    %79 = arith.divf %77, %78 : vector<16x256xf32>
    %80 = arith.mulf %73, %79 : vector<16x256xf32>
    %81 = arith.mulf %80, %74 : vector<16x256xf32>
    %82 = arith.index_cast %c3_i32 : i32 to index
    %c0_29 = arith.constant 0 : index
    %c0_30 = arith.constant 0 : index
    %83 = vector.load %arg4[%82, %c0_29, %c0_30] : memref<4x256x128xf32, #tpu.memory_space<vmem>>, vector<1x256x128xf32>
    %84 = vector.shape_cast %83 : vector<1x256x128xf32> to vector<256x128xf32>
    %cst_31 = arith.constant dense<0.000000e+00> : vector<16x128xf32>
    %85 = tpu.matmul %81, %84, %cst_31 {dimension_numbers = #tpu.dot_dimension_numbers<[1], [0], [0], [1], [0, 0, 1, 1], [], []>} : vector<16x256xf32>, vector<256x128xf32>, vector<16x128xf32> -> vector<16x128xf32>
    %c0_32 = arith.constant 0 : index
    %86 = arith.index_cast %c3_i32 : i32 to index
    %87 = memref.load %arg1[%c0_32, %86] : memref<1x4xf32, #tpu.memory_space<smem>>
    %88 = vector.broadcast %87 : f32 to vector<16x128xf32>
    %89 = arith.mulf %88, %85 : vector<16x128xf32>
    %90 = arith.addf %68, %89 : vector<16x128xf32>
    %c4_i32 = arith.constant 4 : i32
    %c0_33 = arith.constant 0 : index
    %c0_34 = arith.constant 0 : index
    %91 = vector.load %arg5[%c0_33, %c0_34] : memref<16x128xf32, #tpu.memory_space<vmem>>, vector<16x128xf32>
    tpu.vector_store %arg5[%c0_33, %c0_34], %90 {strides = array<i32>} : memref<16x128xf32, #tpu.memory_space<vmem>>, vector<16x128xf32>,
    return
  }
  func.func @transform_0(%arg0: i32) -> (i32, i32) {
    %c0_i32 = arith.constant 0 : i32
    %c0_i32_0 = arith.constant 0 : i32
    %c0_i32_1 = arith.constant 0 : i32
    return %c0_i32, %c0_i32_0 : i32, i32
  }
  func.func @transform_1(%arg0: i32) -> (i32, i32) {
    %c0_i32 = arith.constant 0 : i32
    %c0_i32_0 = arith.constant 0 : i32
    return %arg0, %c0_i32 : i32, i32
  }
  func.func @transform_2(%arg0: i32) -> (i32, i32, i32) {
    %c0_i32 = arith.constant 0 : i32
    %c0_i32_0 = arith.constant 0 : i32
    %c0_i32_1 = arith.constant 0 : i32
    %c0_i32_2 = arith.constant 0 : i32
    return %c0_i32, %c0_i32_0, %c0_i32_1 : i32, i32, i32
  }
  func.func @transform_3(%arg0: i32) -> (i32, i32, i32) {
    %c0_i32 = arith.constant 0 : i32
    %c0_i32_0 = arith.constant 0 : i32
    %c0_i32_1 = arith.constant 0 : i32
    %c0_i32_2 = arith.constant 0 : i32
    return %c0_i32, %c0_i32_0, %c0_i32_1 : i32, i32, i32
  }
  func.func @transform_4(%arg0: i32) -> (i32, i32) {
    %c0_i32 = arith.constant 0 : i32
    %c0_i32_0 = arith.constant 0 : i32
    return %arg0, %c0_i32 : i32, i32
  }
}

</mosaic_0001>

<llo_original>
// kernel: tpu_custom_call.1
$region0: #{tpu_custom_call.1}
  #allocation0 [shape = 'u32[]', space=smem, size = 0x4, offset = 0x4, fixed_abs, tag = 'smem constant byte address 0x4 - core index']
  #allocation1 [shape = 'u32[144,128]{1,0:T(1,128)}', space=vmem, size = 0x12000, scoped, tag = 'internal scratch']
  %s0 = inlined_call_operand.hbm [shape: f32[1,4], index: 0, kind: input, shape index: {}]
  %s1 = inlined_call_operand.hbm [shape: f32[16,128], index: 1, kind: input, shape index: {}]
  %s2 = inlined_call_operand.hbm [shape: f32[4,128,512], index: 2, kind: input, shape index: {}]
  %s3 = inlined_call_operand.hbm [shape: f32[4,256,128], index: 3, kind: input, shape index: {}]
  %s4 = inlined_call_operand.hbm [shape: f32[16,128], index: 4, kind: output, shape index: {}]
  %s5 = sld [smem:[#allocation0]]
  $region42: #{tpu_custom_call.1} parent=0
    _
  %s7 = ssub.s32 1, %s5
  %s8 = scalar_select 0, %s7, %s5
  $region1: #{tpu_custom_call.1} parent=0
    #allocation2 [shape = 'u8[512]{0}', space=smem, size = 0x200, scoped, tag = 'input window, operand 0, single buffered']
    #allocation3 [shape = 's32[1]{0}', space=sflag, size = 0x4, scoped, tag = 'scoped memory for tpu_custom_call.1']
    #allocation4 [shape = 's32[1]{0}', space=sflag, size = 0x4, scoped, tag = 'scoped memory for tpu_custom_call.1']
    #allocation5 [shape = 's32[1]{0}', space=sflag, size = 0x4, scoped, tag = 'scoped memory for tpu_custom_call.1']
    #allocation6 [shape = 'u8[8192]{0}', space=vmem, size = 0x2000, scoped, tag = 'input window, operand 1, single buffered']
    #allocation7 [shape = 'u8[1048576]{0}', space=vmem, size = 0x100000, scoped, tag = 'input window, operand 2, single buffered']
    #allocation8 [shape = 's32[1]{0}', space=sflag, size = 0x4, scoped, tag = 'scoped memory for tpu_custom_call.1']
    #allocation9 [shape = 'u8[524288]{0}', space=vmem, size = 0x80000, scoped, tag = 'input window, operand 3, single buffered']
    #allocation10 [shape = 'u8[8192]{0}', space=vmem, size = 0x2000, scoped, tag = 'output window, operand 0, single buffered']
    %9 = vsyncpa [#allocation5], 0
    %10 = vsyncpa [#allocation3], 0
    %11 = vsyncpa [#allocation8], 0
    %12 = vsyncpa [#allocation4], 0
    // Predicated region
    $region2: #{tpu_custom_call.1} parent=1 // pred_check
      _
    $region3: #{tpu_custom_call.1} parent=1 // pred_check_branch
      %14 = sbr.rel (0) target = $region5
    $region4: #{tpu_custom_call.1} parent=1 // pred_region
      %s16 = ssub.s32 16, 16
      %17 = vsyncadd [#allocation5], %s16
      %20 = dma.hbm_to_smem %s0, 16, [#allocation2], [#allocation5]
    $region5: #{tpu_custom_call.1} parent=1 // pred_fallthru
      _
    // Predicated region
    $region6: #{tpu_custom_call.1} parent=1 // pred_check
      _
    $region7: #{tpu_custom_call.1} parent=1 // pred_check_branch
      %22 = sbr.rel (0) target = $region9
    $region8: #{tpu_custom_call.1} parent=1 // pred_region
      %s24 = ssub.s32 256, 256
      %25 = vsyncadd [#allocation3], %s24
      %s26 = sshll.u32 [#allocation6], 4
      %s27 = int_to_ptr.vmem [resolvable:$true] %s26
      %32 = dma.hbm_to_vmem [thread:$0]  %s1, 256, %s27, [#allocation3], 128, 128, 8
    $region9: #{tpu_custom_call.1} parent=1 // pred_fallthru
      _
    // Predicated region
    $region10: #{tpu_custom_call.1} parent=1 // pred_check
      _
    $region11: #{tpu_custom_call.1} parent=1 // pred_check_branch
      %34 = sbr.rel (0) target = $region13
    $region12: #{tpu_custom_call.1} parent=1 // pred_region
      %s36 = ssub.s32 32768, 32768
      %37 = vsyncadd [#allocation8], %s36
      %s38 = sshll.u32 [#allocation7], 4
      %s39 = int_to_ptr.vmem [resolvable:$true] %s38
      %44 = dma.hbm_to_vmem [thread:$0]  %s2, 32768, %s39, [#allocation8], 512, 512, 32
    $region13: #{tpu_custom_call.1} parent=1 // pred_fallthru
      _
    // Predicated region
    $region14: #{tpu_custom_call.1} parent=1 // pred_check
      _
    $region15: #{tpu_custom_call.1} parent=1 // pred_check_branch
      %46 = sbr.rel (0) target = $region17
    $region16: #{tpu_custom_call.1} parent=1 // pred_region
      %s48 = ssub.s32 16384, 16384
      %49 = vsyncadd [#allocation8], %s48
      %s50 = sshll.u32 [#allocation9], 4
      %s51 = int_to_ptr.vmem [resolvable:$true] %s50
      %56 = dma.hbm_to_vmem [thread:$0]  %s3, 16384, %s51, [#allocation8], 128, 128, 8
    $region17: #{tpu_custom_call.1} parent=1 // pred_fallthru
      _
    // Predicated region
    $region18: #{tpu_custom_call.1} parent=1 // pred_check
      _
    $region19: #{tpu_custom_call.1} parent=1 // pred_check_branch
      %58 = sbr.rel (0) target = $region21
    $region20: #{tpu_custom_call.1} parent=1 // pred_region
      %59 = dma.done [#allocation5], 16
    $region21: #{tpu_custom_call.1} parent=1 // pred_fallthru
      _
    // Predicated region
    $region22: #{tpu_custom_call.1} parent=1 // pred_check
      _
    $region23: #{tpu_custom_call.1} parent=1 // pred_check_branch
      %61 = sbr.rel (0) target = $region25
    $region24: #{tpu_custom_call.1} parent=1 // pred_region
      %62 = dma.done [#allocation3], 256
    $region25: #{tpu_custom_call.1} parent=1 // pred_fallthru
      _
    // Predicated region
    $region26: #{tpu_custom_call.1} parent=1 // pred_check
      _
    $region27: #{tpu_custom_call.1} parent=1 // pred_check_branch
      %64 = sbr.rel (0) target = $region29
    $region28: #{tpu_custom_call.1} parent=1 // pred_region
      %65 = dma.done [#allocation8], 32768
    $region29: #{tpu_custom_call.1} parent=1 // pred_fallthru
      _
    // Predicated region
    $region30: #{tpu_custom_call.1} parent=1 // pred_check
      _
    $region31: #{tpu_custom_call.1} parent=1 // pred_check_branch
      %67 = sbr.rel (0) target = $region33
    $region32: #{tpu_custom_call.1} parent=1 // pred_region
      %68 = dma.done [#allocation8], 16384
    $region33: #{tpu_custom_call.1} parent=1 // pred_fallthru
      _
    %69 = sfence
    %v70 = vld [vmem:[#allocation6] sm:$0xff]
    %v71 = vld [vmem:[#allocation6 + $0x8] sm:$0xff]
    %v72 = vld [vmem:[#allocation7] sm:$0xff]
    %v73 = vld [vmem:[#allocation7 + $0x8] sm:$0xff]
    %v74 = vld [vmem:[#allocation7 + $0x10] sm:$0xff]
    %v75 = vld [vmem:[#allocation7 + $0x18] sm:$0xff]
    %v76 = vld [vmem:[#allocation7 + $0x20] sm:$0xff]
    %v77 = vld [vmem:[#allocation7 + $0x28] sm:$0xff]
    %v78 = vld [vmem:[#allocation7 + $0x30] sm:$0xff]
    %v79 = vld [vmem:[#allocation7 + $0x38] sm:$0xff]
    %v80 = vld [vmem:[#allocation7 + $0x40] sm:$0xff]
    %v81 = vld [vmem:[#allocation7 + $0x48] sm:$0xff]
    %v82 = vld [vmem:[#allocation7 + $0x50] sm:$0xff]
    %v83 = vld [vmem:[#allocation7 + $0x58] sm:$0xff]
    %v84 = vld [vmem:[#allocation7 + $0x60] sm:$0xff]
    %v85 = vld [vmem:[#allocation7 + $0x68] sm:$0xff]
    %v86 = vld [vmem:[#allocation7 + $0x70] sm:$0xff]
    %v87 = vld [vmem:[#allocation7 + $0x78] sm:$0xff]
    %v88 = vld [vmem:[#allocation7 + $0x80] sm:$0xff]
    %v89 = vld [vmem:[#allocation7 + $0x88] sm:$0xff]
    %v90 = vld [vmem:[#allocation7 + $0x90] sm:$0xff]
    %v91 = vld [vmem:[#allocation7 + $0x98] sm:$0xff]
    %v92 = vld [vmem:[#allocation7 + $0xa0] sm:$0xff]
    %v93 = vld [vmem:[#allocation7 + $0xa8] sm:$0xff]
    %v94 = vld [vmem:[#allocation7 + $0xb0] sm:$0xff]
    %v95 = vld [vmem:[#allocation7 + $0xb8] sm:$0xff]
    %v96 = vld [vmem:[#allocation7 + $0xc0] sm:$0xff]
    %v97 = vld [vmem:[#allocation7 + $0xc8] sm:$0xff]
    %v98 = vld [vmem:[#allocation7 + $0xd0] sm:$0xff]
    %v99 = vld [vmem:[#allocation7 + $0xd8] sm:$0xff]
    %v100 = vld [vmem:[#allocation7 + $0xe0] sm:$0xff]
    %v101 = vld [vmem:[#allocation7 + $0xe8] sm:$0xff]
    %v102 = vld [vmem:[#allocation7 + $0xf0] sm:$0xff]
    %v103 = vld [vmem:[#allocation7 + $0xf8] sm:$0xff]
    %v104 = vld [vmem:[#allocation7 + $0x100] sm:$0xff]
    %v105 = vld [vmem:[#allocation7 + $0x108] sm:$0xff]
    %v106 = vld [vmem:[#allocation7 + $0x110] sm:$0xff]
    %v107 = vld [vmem:[#allocation7 + $0x118] sm:$0xff]
    %v108 = vld [vmem:[#allocation7 + $0x120] sm:$0xff]
    %v109 = vld [vmem:[#allocation7 + $0x128] sm:$0xff]
    %v110 = vld [vmem:[#allocation7 + $0x130] sm:$0xff]
    %v111 = vld [vmem:[#allocation7 + $0x138] sm:$0xff]
    %v112 = vld [vmem:[#allocation7 + $0x140] sm:$0xff]
    %v113 = vld [vmem:[#allocation7 + $0x148] sm:$0xff]
    %v114 = vld [vmem:[#allocation7 + $0x150] sm:$0xff]
    %v115 = vld [vmem:[#allocation7 + $0x158] sm:$0xff]
    %v116 = vld [vmem:[#allocation7 + $0x160] sm:$0xff]
    %v117 = vld [vmem:[#allocation7 + $0x168] sm:$0xff]
    %v118 = vld [vmem:[#allocation7 + $0x170] sm:$0xff]
    %v119 = vld [vmem:[#allocation7 + $0x178] sm:$0xff]
    %v120 = vld [vmem:[#allocation7 + $0x180] sm:$0xff]
    %v121 = vld [vmem:[#allocation7 + $0x188] sm:$0xff]
    %v122 = vld [vmem:[#allocation7 + $0x190] sm:$0xff]
    %v123 = vld [vmem:[#allocation7 + $0x198] sm:$0xff]
    %v124 = vld [vmem:[#allocation7 + $0x1a0] sm:$0xff]
    %v125 = vld [vmem:[#allocation7 + $0x1a8] sm:$0xff]
    %v126 = vld [vmem:[#allocation7 + $0x1b0] sm:$0xff]
    %v127 = vld [vmem:[#allocation7 + $0x1b8] sm:$0xff]
    %v128 = vld [vmem:[#allocation7 + $0x1c0] sm:$0xff]
    %v129 = vld [vmem:[#allocation7 + $0x1c8] sm:$0xff]
    %v130 = vld [vmem:[#allocation7 + $0x1d0] sm:$0xff]
    %v131 = vld [vmem:[#allocation7 + $0x1d8] sm:$0xff]
    %v132 = vld [vmem:[#allocation7 + $0x1e0] sm:$0xff]
    %v133 = vld [vmem:[#allocation7 + $0x1e8] sm:$0xff]
    %v134 = vld [vmem:[#allocation7 + $0x1f0] sm:$0xff]
    %v135 = vld [vmem:[#allocation7 + $0x1f8] sm:$0xff]
    %136 = vmatprep.subr.mxu0 %v133
    %137 = vmatpush1.msra.mxu0 %v132
    %138 = vmatprep.subr.mxu0 %v129
    %139 = vmatpush1.msra.mxu0 %v128
    %140 = vmatprep.subr.mxu0 %v125
    %141 = vmatpush1.msra.mxu0 %v124
    %142 = vmatprep.subr.mxu0 %v121
    %143 = vmatpush1.msra.mxu0 %v120
    %144 = vmatprep.subr.mxu0 %v117
    %145 = vmatpush1.msra.mxu0 %v116
    %146 = vmatprep.subr.mxu0 %v113
    %147 = vmatpush1.msra.mxu0 %v112
    %148 = vmatprep.subr.mxu0 %v109
    %149 = vmatpush1.msra.mxu0 %v108
    %150 = vmatprep.subr.mxu0 %v105
    %151 = vmatpush1.msra.mxu0 %v104
    %152 = vmatprep.subr.mxu0 %v101
    %153 = vmatpush1.msra.mxu0 %v100
    %154 = vmatprep.subr.mxu0 %v97
    %155 = vmatpush1.msra.mxu0 %v96
    %156 = vmatprep.subr.mxu0 %v93
    %157 = vmatpush1.msra.mxu0 %v92
    %158 = vmatprep.subr.mxu0 %v89
    %159 = vmatpush1.msra.mxu0 %v88
    %160 = vmatprep.subr.mxu0 %v85
    %161 = vmatpush1.msra.mxu0 %v84
    %162 = vmatprep.subr.mxu0 %v81
    %163 = vmatpush1.msra.mxu0 %v80
    %164 = vmatprep.subr.mxu0 %v77
    %165 = vmatpush1.msra.mxu0 %v76
    %166 = vmatprep.subr.mxu0 %v73
    %167 = vmatpush1.msra.mxu0 %v72
    %168 = vmatprep.subr.mxu0 0.0
    %169 = vmatpush2.msra.mxu0 0.0
    %170 = vmatprep.subr.mxu0 0.0
    %171 = vmatpush2.msra.mxu0 0.0
    %172 = vmatprep.subr.mxu0 0.0
    %173 = vmatpush2.msra.mxu0 0.0
    %174 = vmatprep.subr.mxu0 0.0
    %175 = vmatpush2.msra.mxu0 0.0
    %176 = vmatprep.subr.mxu0 0.0
    %177 = vmatpush2.msra.mxu0 0.0
    %178 = vmatprep.subr.mxu0 0.0
    %179 = vmatpush2.msra.mxu0 0.0
    %180 = vmatprep.subr.mxu0 0.0
    %181 = vmatpush2.msra.mxu0 0.0
    %182 = vmatprep.subr.mxu0 0.0
    %183 = vmatpush2.msra.mxu0 0.0
    %184 = vmatprep.subr.mxu0 0.0
    %185 = vmatpush2.msra.mxu0 0.0
    %186 = vmatprep.subr.mxu0 0.0
    %187 = vmatpush2.msra.mxu0 0.0
    %188 = vmatprep.subr.mxu0 0.0
    %189 = vmatpush2.msra.mxu0 0.0
    %190 = vmatprep.subr.mxu0 0.0
    %191 = vmatpush2.msra.mxu0 0.0
    %192 = vmatprep.subr.mxu0 0.0
    %193 = vmatpush2.msra.mxu0 0.0
    %194 = vmatprep.subr.mxu0 0.0
    %195 = vmatpush2.msra.mxu0 0.0
    %196 = vmatprep.subr.mxu0 0.0
    %197 = vmatpush2.msra.mxu0 0.0
    %198 = vmatprep.subr.mxu0 0.0
    %199 = vmatpush2.msra.mxu0 0.0
    %200 = vmatprep.mubr.f32.mxu0 0.0
    %201 = vmatmul.mubr.f32.gmra.mxu0 %v70
    %v202 = vpop.f32.mrf.mxu0
    %v203 = vadd.f32 0.0, %v202
    %v204 = vpop.f32.mrf.mxu0
    %v205 = vadd.f32 0.0, %v204
    %206 = vmatprep.mubr.f32.mxu0 0.0
    %207 = vmatmul.mubr.f32.gmra.mxu0 %v71
    %v208 = vpop.f32.mrf.mxu0
    %v209 = vadd.f32 0.0, %v208
    %v210 = vpop.f32.mrf.mxu0
    %v211 = vadd.f32 0.0, %v210
    %212 = vdwg.mxu0
    %213 = vmatprep.subr.mxu0 %v135
    %214 = vmatpush1.msra.mxu0 %v134
    %215 = vmatprep.subr.mxu0 %v131
    %216 = vmatpush1.msra.mxu0 %v130
    %217 = vmatprep.subr.mxu0 %v127
    %218 = vmatpush1.msra.mxu0 %v126
    %219 = vmatprep.subr.mxu0 %v123
    %220 = vmatpush1.msra.mxu0 %v122
    %221 = vmatprep.subr.mxu0 %v119
    %222 = vmatpush1.msra.mxu0 %v118
    %223 = vmatprep.subr.mxu0 %v115
    %224 = vmatpush1.msra.mxu0 %v114
    %225 = vmatprep.subr.mxu0 %v111
    %226 = vmatpush1.msra.mxu0 %v110
    %227 = vmatprep.subr.mxu0 %v107
    %228 = vmatpush1.msra.mxu0 %v106
    %229 = vmatprep.subr.mxu0 %v103
    %230 = vmatpush1.msra.mxu0 %v102
    %231 = vmatprep.subr.mxu0 %v99
    %232 = vmatpush1.msra.mxu0 %v98
    %233 = vmatprep.subr.mxu0 %v95
    %234 = vmatpush1.msra.mxu0 %v94
    %235 = vmatprep.subr.mxu0 %v91
    %236 = vmatpush1.msra.mxu0 %v90
    %237 = vmatprep.subr.mxu0 %v87
    %238 = vmatpush1.msra.mxu0 %v86
    %239 = vmatprep.subr.mxu0 %v83
    %240 = vmatpush1.msra.mxu0 %v82
    %241 = vmatprep.subr.mxu0 %v79
    %242 = vmatpush1.msra.mxu0 %v78
    %243 = vmatprep.subr.mxu0 %v75
    %244 = vmatpush1.msra.mxu0 %v74
    %245 = vmatprep.subr.mxu0 0.0
    %246 = vmatpush2.msra.mxu0 0.0
    %247 = vmatprep.subr.mxu0 0.0
    %248 = vmatpush2.msra.mxu0 0.0
    %249 = vmatprep.subr.mxu0 0.0
    %250 = vmatpush2.msra.mxu0 0.0
    %251 = vmatprep.subr.mxu0 0.0
    %252 = vmatpush2.msra.mxu0 0.0
    %253 = vmatprep.subr.mxu0 0.0
    %254 = vmatpush2.msra.mxu0 0.0
    %255 = vmatprep.subr.mxu0 0.0
    %256 = vmatpush2.msra.mxu0 0.0
    %257 = vmatprep.subr.mxu0 0.0
    %258 = vmatpush2.msra.mxu0 0.0
    %259 = vmatprep.subr.mxu0 0.0
    %260 = vmatpush2.msra.mxu0 0.0
    %261 = vmatprep.subr.mxu0 0.0
    %262 = vmatpush2.msra.mxu0 0.0
    %263 = vmatprep.subr.mxu0 0.0
    %264 = vmatpush2.msra.mxu0 0.0
    %265 = vmatprep.subr.mxu0 0.0
    %266 = vmatpush2.msra.mxu0 0.0
    %267 = vmatprep.subr.mxu0 0.0
    %268 = vmatpush2.msra.mxu0 0.0
    %269 = vmatprep.subr.mxu0 0.0
    %270 = vmatpush2.msra.mxu0 0.0
    %271 = vmatprep.subr.mxu0 0.0
    %272 = vmatpush2.msra.mxu0 0.0
    %273 = vmatprep.subr.mxu0 0.0
    %274 = vmatpush2.msra.mxu0 0.0
    %275 = vmatprep.subr.mxu0 0.0
    %276 = vmatpush2.msra.mxu0 0.0
    %277 = vmatprep.mubr.f32.mxu0 0.0
    %278 = vmatmul.mubr.f32.gmra.mxu0 %v70
    %v279 = vpop.f32.mrf.mxu0
    %v280 = vadd.f32 0.0, %v279
    %v281 = vpop.f32.mrf.mxu0
    %v282 = vadd.f32 0.0, %v281
    %283 = vmatprep.mubr.f32.mxu0 0.0
    %284 = vmatmul.mubr.f32.gmra.mxu0 %v71
    %v285 = vpop.f32.mrf.mxu0
    %v286 = vadd.f32 0.0, %v285
    %v287 = vpop.f32.mrf.mxu0
    %v288 = vadd.f32 0.0, %v287
    %289 = vdwg.mxu0
    %v290 = vxor.u32 %v203, 2147483648
    %v291 = vxor.u32 %v205, 2147483648
    %v292 = vxor.u32 %v209, 2147483648
    %v293 = vxor.u32 %v211, 2147483648
    %v294 = vmul.f32 %v290, 1.442695
    %v295 = vpow.pop %v294
    %v296 = vmul.f32 %v291, 1.442695
    %v297 = vpow.pop %v296
    %v298 = vmul.f32 %v292, 1.442695
    %v299 = vpow.pop %v298
    %v300 = vmul.f32 %v293, 1.442695
    %v301 = vpow.pop %v300
    %v302 = vadd.f32 %v295, 1.0
    %v303 = vadd.f32 %v297, 1.0
    %v304 = vadd.f32 %v299, 1.0
    %v305 = vadd.f32 %v301, 1.0
    %v306 = vrcp.pop %v302
    %v307 = vmul.f32 1.0, %v306
    %v308 = vrcp.pop %v303
    %v309 = vmul.f32 1.0, %v308
    %v310 = vrcp.pop %v304
    %v311 = vmul.f32 1.0, %v310
    %v312 = vrcp.pop %v305
    %v313 = vmul.f32 1.0, %v312
    %v314 = vmul.f32 %v203, %v307
    %v315 = vmul.f32 %v205, %v309
    %v316 = vmul.f32 %v209, %v311
    %v317 = vmul.f32 %v211, %v313
    %v318 = vmul.f32 %v314, %v280
    %v319 = vmul.f32 %v315, %v282
    %v320 = vmul.f32 %v316, %v286
    %v321 = vmul.f32 %v317, %v288
    %v322 = vld [vmem:[#allocation9] sm:$0xff]
    %v323 = vld [vmem:[#allocation9 + $0x8] sm:$0xff]
    %v324 = vld [vmem:[#allocation9 + $0x10] sm:$0xff]
    %v325 = vld [vmem:[#allocation9 + $0x18] sm:$0xff]
    %v326 = vld [vmem:[#allocation9 + $0x20] sm:$0xff]
    %v327 = vld [vmem:[#allocation9 + $0x28] sm:$0xff]
    %v328 = vld [vmem:[#allocation9 + $0x30] sm:$0xff]
    %v329 = vld [vmem:[#allocation9 + $0x38] sm:$0xff]
    %v330 = vld [vmem:[#allocation9 + $0x40] sm:$0xff]
    %v331 = vld [vmem:[#allocation9 + $0x48] sm:$0xff]
    %v332 = vld [vmem:[#allocation9 + $0x50] sm:$0xff]
    %v333 = vld [vmem:[#allocation9 + $0x58] sm:$0xff]
    %v334 = vld [vmem:[#allocation9 + $0x60] sm:$0xff]
    %v335 = vld [vmem:[#allocation9 + $0x68] sm:$0xff]
    %v336 = vld [vmem:[#allocation9 + $0x70] sm:$0xff]
    %v337 = vld [vmem:[#allocation9 + $0x78] sm:$0xff]
    %v338 = vld [vmem:[#allocation9 + $0x80] sm:$0xff]
    %v339 = vld [vmem:[#allocation9 + $0x88] sm:$0xff]
    %v340 = vld [vmem:[#allocation9 + $0x90] sm:$0xff]
    %v341 = vld [vmem:[#allocation9 + $0x98] sm:$0xff]
    %v342 = vld [vmem:[#allocation9 + $0xa0] sm:$0xff]
    %v343 = vld [vmem:[#allocation9 + $0xa8] sm:$0xff]
    %v344 = vld [vmem:[#allocation9 + $0xb0] sm:$0xff]
    %v345 = vld [vmem:[#allocation9 + $0xb8] sm:$0xff]
    %v346 = vld [vmem:[#allocation9 + $0xc0] sm:$0xff]
    %v347 = vld [vmem:[#allocation9 + $0xc8] sm:$0xff]
    %v348 = vld [vmem:[#allocation9 + $0xd0] sm:$0xff]
    %v349 = vld [vmem:[#allocation9 + $0xd8] sm:$0xff]
    %v350 = vld [vmem:[#allocation9 + $0xe0] sm:$0xff]
    %v351 = vld [vmem:[#allocation9 + $0xe8] sm:$0xff]
    %v352 = vld [vmem:[#allocation9 + $0xf0] sm:$0xff]
    %v353 = vld [vmem:[#allocation9 + $0xf8] sm:$0xff]
    %354 = vmatprep.subr.mxu0 0.0
    %355 = vmatpush1.msra.mxu0 %v337
    %356 = vmatprep.subr.mxu0 0.0
    %357 = vmatpush1.msra.mxu0 %v336
    %358 = vmatprep.subr.mxu0 0.0
    %359 = vmatpush1.msra.mxu0 %v335
    %360 = vmatprep.subr.mxu0 0.0
    %361 = vmatpush1.msra.mxu0 %v334
    %362 = vmatprep.subr.mxu0 0.0
    %363 = vmatpush1.msra.mxu0 %v333
    %364 = vmatprep.subr.mxu0 0.0
    %365 = vmatpush1.msra.mxu0 %v332
    %366 = vmatprep.subr.mxu0 0.0
    %367 = vmatpush1.msra.mxu0 %v331
    %368 = vmatprep.subr.mxu0 0.0
    %369 = vmatpush1.msra.mxu0 %v330
    %370 = vmatprep.subr.mxu0 0.0
    %371 = vmatpush1.msra.mxu0 %v329
    %372 = vmatprep.subr.mxu0 0.0
    %373 = vmatpush1.msra.mxu0 %v328
    %374 = vmatprep.subr.mxu0 0.0
    %375 = vmatpush1.msra.mxu0 %v327
    %376 = vmatprep.subr.mxu0 0.0
    %377 = vmatpush1.msra.mxu0 %v326
    %378 = vmatprep.subr.mxu0 0.0
    %379 = vmatpush1.msra.mxu0 %v325
    %380 = vmatprep.subr.mxu0 0.0
    %381 = vmatpush1.msra.mxu0 %v324
    %382 = vmatprep.subr.mxu0 0.0
    %383 = vmatpush1.msra.mxu0 %v323
    %384 = vmatprep.subr.mxu0 0.0
    %385 = vmatpush1.msra.mxu0 %v322
    %386 = vmatprep.subr.mxu0 0.0
    %387 = vmatpush2.msra.mxu0 %v353
    %388 = vmatprep.subr.mxu0 0.0
    %389 = vmatpush2.msra.mxu0 %v352
    %390 = vmatprep.subr.mxu0 0.0
    %391 = vmatpush2.msra.mxu0 %v351
    %392 = vmatprep.subr.mxu0 0.0
    %393 = vmatpush2.msra.mxu0 %v350
    %394 = vmatprep.subr.mxu0 0.0
    %395 = vmatpush2.msra.mxu0 %v349
    %396 = vmatprep.subr.mxu0 0.0
    %397 = vmatpush2.msra.mxu0 %v348
    %398 = vmatprep.subr.mxu0 0.0
    %399 = vmatpush2.msra.mxu0 %v347
    %400 = vmatprep.subr.mxu0 0.0
    %401 = vmatpush2.msra.mxu0 %v346
    %402 = vmatprep.subr.mxu0 0.0
    %403 = vmatpush2.msra.mxu0 %v345
    %404 = vmatprep.subr.mxu0 0.0
    %405 = vmatpush2.msra.mxu0 %v344
    %406 = vmatprep.subr.mxu0 0.0
    %407 = vmatpush2.msra.mxu0 %v343
    %408 = vmatprep.subr.mxu0 0.0
    %409 = vmatpush2.msra.mxu0 %v342
    %410 = vmatprep.subr.mxu0 0.0
    %411 = vmatpush2.msra.mxu0 %v341
    %412 = vmatprep.subr.mxu0 0.0
    %413 = vmatpush2.msra.mxu0 %v340
    %414 = vmatprep.subr.mxu0 0.0
    %415 = vmatpush2.msra.mxu0 %v339
    %416 = vmatprep.subr.mxu0 0.0
    %417 = vmatpush2.msra.mxu0 %v338
    %418 = vmatprep.mubr.f32.mxu0 %v319
    %419 = vmatmul.mubr.f32.gmra.mxu0 %v318
    %v420 = vpop.f32.mrf.mxu0
    %v421 = vadd.f32 0.0, %v420
    %v422 = vpop.f32.mrf.mxu0
    %423 = vmatprep.mubr.f32.mxu0 %v321
    %424 = vmatmul.mubr.f32.gmra.mxu0 %v320
    %v425 = vpop.f32.mrf.mxu0
    %v426 = vadd.f32 0.0, %v425
    %v427 = vpop.f32.mrf.mxu0
    %428 = vdwg.mxu0
    %s429 = sld [smem:[#allocation2]]
    %v430 = vstv %s429
    %v431 = vmul.f32 %v430, %v421
    %v432 = vmul.f32 %v430, %v426
    %v433 = vadd.f32 %v70, %v431
    %v434 = vadd.f32 %v71, %v432
    %s435 = scalar_lea.vmem [#allocation7], 512
    %v436 = vld [vmem:[%s435] sm:$0xff]
    %v437 = vld [vmem:[%s435 + $0x8] sm:$0xff]
    %v438 = vld [vmem:[%s435 + $0x10] sm:$0xff]
    %v439 = vld [vmem:[%s435 + $0x18] sm:$0xff]
    %v440 = vld [vmem:[%s435 + $0x20] sm:$0xff]
    %v441 = vld [vmem:[%s435 + $0x28] sm:$0xff]
    %v442 = vld [vmem:[%s435 + $0x30] sm:$0xff]
    %v443 = vld [vmem:[%s435 + $0x38] sm:$0xff]
    %v444 = vld [vmem:[%s435 + $0x40] sm:$0xff]
    %v445 = vld [vmem:[%s435 + $0x48] sm:$0xff]
    %v446 = vld [vmem:[%s435 + $0x50] sm:$0xff]
    %v447 = vld [vmem:[%s435 + $0x58] sm:$0xff]
    %v448 = vld [vmem:[%s435 + $0x60] sm:$0xff]
    %v449 = vld [vmem:[%s435 + $0x68] sm:$0xff]
    %v450 = vld [vmem:[%s435 + $0x70] sm:$0xff]
    %v451 = vld [vmem:[%s435 + $0x78] sm:$0xff]
    %v452 = vld [vmem:[%s435 + $0x80] sm:$0xff]
    %v453 = vld [vmem:[%s435 + $0x88] sm:$0xff]
    %v454 = vld [vmem:[%s435 + $0x90] sm:$0xff]
    %v455 = vld [vmem:[%s435 + $0x98] sm:$0xff]
    %v456 = vld [vmem:[%s435 + $0xa0] sm:$0xff]
    %v457 = vld [vmem:[%s435 + $0xa8] sm:$0xff]
    %v458 = vld [vmem:[%s435 + $0xb0] sm:$0xff]
    %v459 = vld [vmem:[%s435 + $0xb8] sm:$0xff]
    %v460 = vld [vmem:[%s435 + $0xc0] sm:$0xff]
    %v461 = vld [vmem:[%s435 + $0xc8] sm:$0xff]
    %v462 = vld [vmem:[%s435 + $0xd0] sm:$0xff]
    %v463 = vld [vmem:[%s435 + $0xd8] sm:$0xff]
    %v464 = vld [vmem:[%s435 + $0xe0] sm:$0xff]
    %v465 = vld [vmem:[%s435 + $0xe8] sm:$0xff]
    %v466 = vld [vmem:[%s435 + $0xf0] sm:$0xff]
    %v467 = vld [vmem:[%s435 + $0xf8] sm:$0xff]
    %v468 = vld [vmem:[%s435 + $0x100] sm:$0xff]
    %v469 = vld [vmem:[%s435 + $0x108] sm:$0xff]
    %v470 = vld [vmem:[%s435 + $0x110] sm:$0xff]
    %v471 = vld [vmem:[%s435 + $0x118] sm:$0xff]
    %v472 = vld [vmem:[%s435 + $0x120] sm:$0xff]
    %v473 = vld [vmem:[%s435 + $0x128] sm:$0xff]
    %v474 = vld [vmem:[%s435 + $0x130] sm:$0xff]
    %v475 = vld [vmem:[%s435 + $0x138] sm:$0xff]
    %v476 = vld [vmem:[%s435 + $0x140] sm:$0xff]
    %v477 = vld [vmem:[%s435 + $0x148] sm:$0xff]
    %v478 = vld [vmem:[%s435 + $0x150] sm:$0xff]
    %v479 = vld [vmem:[%s435 + $0x158] sm:$0xff]
    %v480 = vld [vmem:[%s435 + $0x160] sm:$0xff]
    %v481 = vld [vmem:[%s435 + $0x168] sm:$0xff]
    %v482 = vld [vmem:[%s435 + $0x170] sm:$0xff]
    %v483 = vld [vmem:[%s435 + $0x178] sm:$0xff]
    %v484 = vld [vmem:[%s435 + $0x180] sm:$0xff]
    %v485 = vld [vmem:[%s435 + $0x188] sm:$0xff]
    %v486 = vld [vmem:[%s435 + $0x190] sm:$0xff]
    %v487 = vld [vmem:[%s435 + $0x198] sm:$0xff]
    %v488 = vld [vmem:[%s435 + $0x1a0] sm:$0xff]
    %v489 = vld [vmem:[%s435 + $0x1a8] sm:$0xff]
    %v490 = vld [vmem:[%s435 + $0x1b0] sm:$0xff]
    %v491 = vld [vmem:[%s435 + $0x1b8] sm:$0xff]
    %v492 = vld [vmem:[%s435 + $0x1c0] sm:$0xff]
    %v493 = vld [vmem:[%s435 + $0x1c8] sm:$0xff]
    %v494 = vld [vmem:[%s435 + $0x1d0] sm:$0xff]
    %v495 = vld [vmem:[%s435 + $0x1d8] sm:$0xff]
    %v496 = vld [vmem:[%s435 + $0x1e0] sm:$0xff]
    %v497 = vld [vmem:[%s435 + $0x1e8] sm:$0xff]
    %v498 = vld [vmem:[%s435 + $0x1f0] sm:$0xff]
    %v499 = vld [vmem:[%s435 + $0x1f8] sm:$0xff]
    %500 = vmatprep.subr.mxu0 %v497
    %501 = vmatpush1.msra.mxu0 %v496
    %502 = vmatprep.subr.mxu0 %v493
    %503 = vmatpush1.msra.mxu0 %v492
    %504 = vmatprep.subr.mxu0 %v489
    %505 = vmatpush1.msra.mxu0 %v488
    %506 = vmatprep.subr.mxu0 %v485
    %507 = vmatpush1.msra.mxu0 %v484
    %508 = vmatprep.subr.mxu0 %v481
    %509 = vmatpush1.msra.mxu0 %v480
    %510 = vmatprep.subr.mxu0 %v477
    %511 = vmatpush1.msra.mxu0 %v476
    %512 = vmatprep.subr.mxu0 %v473
    %513 = vmatpush1.msra.mxu0 %v472
    %514 = vmatprep.subr.mxu0 %v469
    %515 = vmatpush1.msra.mxu0 %v468
    %516 = vmatprep.subr.mxu0 %v465
    %517 = vmatpush1.msra.mxu0 %v464
    %518 = vmatprep.subr.mxu0 %v461
    %519 = vmatpush1.msra.mxu0 %v460
    %520 = vmatprep.subr.mxu0 %v457
    %521 = vmatpush1.msra.mxu0 %v456
    %522 = vmatprep.subr.mxu0 %v453
    %523 = vmatpush1.msra.mxu0 %v452
    %524 = vmatprep.subr.mxu0 %v449
    %525 = vmatpush1.msra.mxu0 %v448
    %526 = vmatprep.subr.mxu0 %v445
    %527 = vmatpush1.msra.mxu0 %v444
    %528 = vmatprep.subr.mxu0 %v441
    %529 = vmatpush1.msra.mxu0 %v440
    %530 = vmatprep.subr.mxu0 %v437
    %531 = vmatpush1.msra.mxu0 %v436
    %532 = vmatprep.subr.mxu0 0.0
    %533 = vmatpush2.msra.mxu0 0.0
    %534 = vmatprep.subr.mxu0 0.0
    %535 = vmatpush2.msra.mxu0 0.0
    %536 = vmatprep.subr.mxu0 0.0
    %537 = vmatpush2.msra.mxu0 0.0
    %538 = vmatprep.subr.mxu0 0.0
    %539 = vmatpush2.msra.mxu0 0.0
    %540 = vmatprep.subr.mxu0 0.0
    %541 = vmatpush2.msra.mxu0 0.0
    %542 = vmatprep.subr.mxu0 0.0
    %543 = vmatpush2.msra.mxu0 0.0
    %544 = vmatprep.subr.mxu0 0.0
    %545 = vmatpush2.msra.mxu0 0.0
    %546 = vmatprep.subr.mxu0 0.0
    %547 = vmatpush2.msra.mxu0 0.0
    %548 = vmatprep.subr.mxu0 0.0
    %549 = vmatpush2.msra.mxu0 0.0
    %550 = vmatprep.subr.mxu0 0.0
    %551 = vmatpush2.msra.mxu0 0.0
    %552 = vmatprep.subr.mxu0 0.0
    %553 = vmatpush2.msra.mxu0 0.0
    %554 = vmatprep.subr.mxu0 0.0
    %555 = vmatpush2.msra.mxu0 0.0
    %556 = vmatprep.subr.mxu0 0.0
    %557 = vmatpush2.msra.mxu0 0.0
    %558 = vmatprep.subr.mxu0 0.0
    %559 = vmatpush2.msra.mxu0 0.0
    %560 = vmatprep.subr.mxu0 0.0
    %561 = vmatpush2.msra.mxu0 0.0
    %562 = vmatprep.subr.mxu0 0.0
    %563 = vmatpush2.msra.mxu0 0.0
    %564 = vmatprep.mubr.f32.mxu0 0.0
    %565 = vmatmul.mubr.f32.gmra.mxu0 %v70
    %v566 = vpop.f32.mrf.mxu0
    %v567 = vadd.f32 0.0, %v566
    %v568 = vpop.f32.mrf.mxu0
    %v569 = vadd.f32 0.0, %v568
    %570 = vmatprep.mubr.f32.mxu0 0.0
    %571 = vmatmul.mubr.f32.gmra.mxu0 %v71
    %v572 = vpop.f32.mrf.mxu0
    %v573 = vadd.f32 0.0, %v572
    %v574 = vpop.f32.mrf.mxu0
    %v575 = vadd.f32 0.0, %v574
    %576 = vdwg.mxu0
    %577 = vmatprep.subr.mxu0 %v499
    %578 = vmatpush1.msra.mxu0 %v498
    %579 = vmatprep.subr.mxu0 %v495
    %580 = vmatpush1.msra.mxu0 %v494
    %581 = vmatprep.subr.mxu0 %v491
    %582 = vmatpush1.msra.mxu0 %v490
    %583 = vmatprep.subr.mxu0 %v487
    %584 = vmatpush1.msra.mxu0 %v486
    %585 = vmatprep.subr.mxu0 %v483
    %586 = vmatpush1.msra.mxu0 %v482
    %587 = vmatprep.subr.mxu0 %v479
    %588 = vmatpush1.msra.mxu0 %v478
    %589 = vmatprep.subr.mxu0 %v475
    %590 = vmatpush1.msra.mxu0 %v474
    %591 = vmatprep.subr.mxu0 %v471
    %592 = vmatpush1.msra.mxu0 %v470
    %593 = vmatprep.subr.mxu0 %v467
    %594 = vmatpush1.msra.mxu0 %v466
    %595 = vmatprep.subr.mxu0 %v463
    %596 = vmatpush1.msra.mxu0 %v462
    %597 = vmatprep.subr.mxu0 %v459
    %598 = vmatpush1.msra.mxu0 %v458
    %599 = vmatprep.subr.mxu0 %v455
    %600 = vmatpush1.msra.mxu0 %v454
    %601 = vmatprep.subr.mxu0 %v451
    %602 = vmatpush1.msra.mxu0 %v450
    %603 = vmatprep.subr.mxu0 %v447
    %604 = vmatpush1.msra.mxu0 %v446
    %605 = vmatprep.subr.mxu0 %v443
    %606 = vmatpush1.msra.mxu0 %v442
    %607 = vmatprep.subr.mxu0 %v439
    %608 = vmatpush1.msra.mxu0 %v438
    %609 = vmatprep.subr.mxu0 0.0
    %610 = vmatpush2.msra.mxu0 0.0
    %611 = vmatprep.subr.mxu0 0.0
    %612 = vmatpush2.msra.mxu0 0.0
    %613 = vmatprep.subr.mxu0 0.0
    %614 = vmatpush2.msra.mxu0 0.0
    %615 = vmatprep.subr.mxu0 0.0
    %616 = vmatpush2.msra.mxu0 0.0
    %617 = vmatprep.subr.mxu0 0.0
    %618 = vmatpush2.msra.mxu0 0.0
    %619 = vmatprep.subr.mxu0 0.0
    %620 = vmatpush2.msra.mxu0 0.0
    %621 = vmatprep.subr.mxu0 0.0
    %622 = vmatpush2.msra.mxu0 0.0
    %623 = vmatprep.subr.mxu0 0.0
    %624 = vmatpush2.msra.mxu0 0.0
    %625 = vmatprep.subr.mxu0 0.0
    %626 = vmatpush2.msra.mxu0 0.0
    %627 = vmatprep.subr.mxu0 0.0
    %628 = vmatpush2.msra.mxu0 0.0
    %629 = vmatprep.subr.mxu0 0.0
    %630 = vmatpush2.msra.mxu0 0.0
    %631 = vmatprep.subr.mxu0 0.0
    %632 = vmatpush2.msra.mxu0 0.0
    %633 = vmatprep.subr.mxu0 0.0
    %634 = vmatpush2.msra.mxu0 0.0
    %635 = vmatprep.subr.mxu0 0.0
    %636 = vmatpush2.msra.mxu0 0.0
    %637 = vmatprep.subr.mxu0 0.0
    %638 = vmatpush2.msra.mxu0 0.0
    %639 = vmatprep.subr.mxu0 0.0
    %640 = vmatpush2.msra.mxu0 0.0
    %641 = vmatprep.mubr.f32.mxu0 0.0
    %642 = vmatmul.mubr.f32.gmra.mxu0 %v70
    %v643 = vpop.f32.mrf.mxu0
    %v644 = vadd.f32 0.0, %v643
    %v645 = vpop.f32.mrf.mxu0
    %v646 = vadd.f32 0.0, %v645
    %647 = vmatprep.mubr.f32.mxu0 0.0
    %648 = vmatmul.mubr.f32.gmra.mxu0 %v71
    %v649 = vpop.f32.mrf.mxu0
    %v650 = vadd.f32 0.0, %v649
    %v651 = vpop.f32.mrf.mxu0
    %v652 = vadd.f32 0.0, %v651
    %653 = vdwg.mxu0
    %v654 = vxor.u32 %v567, 2147483648
    %v655 = vxor.u32 %v569, 2147483648
    %v656 = vxor.u32 %v573, 2147483648
    %v657 = vxor.u32 %v575, 2147483648
    %v658 = vmul.f32 %v654, 1.442695
    %v659 = vpow.pop %v658
    %v660 = vmul.f32 %v655, 1.442695
    %v661 = vpow.pop %v660
    %v662 = vmul.f32 %v656, 1.442695
    %v663 = vpow.pop %v662
    %v664 = vmul.f32 %v657, 1.442695
    %v665 = vpow.pop %v664
    %v666 = vadd.f32 %v659, 1.0
    %v667 = vadd.f32 %v661, 1.0
    %v668 = vadd.f32 %v663, 1.0
    %v669 = vadd.f32 %v665, 1.0
    %v670 = vrcp.pop %v666
    %v671 = vmul.f32 1.0, %v670
    %v672 = vrcp.pop %v667
    %v673 = vmul.f32 1.0, %v672
    %v674 = vrcp.pop %v668
    %v675 = vmul.f32 1.0, %v674
    %v676 = vrcp.pop %v669
    %v677 = vmul.f32 1.0, %v676
    %v678 = vmul.f32 %v567, %v671
    %v679 = vmul.f32 %v569, %v673
    %v680 = vmul.f32 %v573, %v675
    %v681 = vmul.f32 %v575, %v677
    %v682 = vmul.f32 %v678, %v644
    %v683 = vmul.f32 %v679, %v646
    %v684 = vmul.f32 %v680, %v650
    %v685 = vmul.f32 %v681, %v652
    %s686 = scalar_lea.vmem [#allocation9], 256
    %v687 = vld [vmem:[%s686] sm:$0xff]
    %v688 = vld [vmem:[%s686 + $0x8] sm:$0xff]
    %v689 = vld [vmem:[%s686 + $0x10] sm:$0xff]
    %v690 = vld [vmem:[%s686 + $0x18] sm:$0xff]
    %v691 = vld [vmem:[%s686 + $0x20] sm:$0xff]
    %v692 = vld [vmem:[%s686 + $0x28] sm:$0xff]
    %v693 = vld [vmem:[%s686 + $0x30] sm:$0xff]
    %v694 = vld [vmem:[%s686 + $0x38] sm:$0xff]
    %v695 = vld [vmem:[%s686 + $0x40] sm:$0xff]
    %v696 = vld [vmem:[%s686 + $0x48] sm:$0xff]
    %v697 = vld [vmem:[%s686 + $0x50] sm:$0xff]
    %v698 = vld [vmem:[%s686 + $0x58] sm:$0xff]
    %v699 = vld [vmem:[%s686 + $0x60] sm:$0xff]
    %v700 = vld [vmem:[%s686 + $0x68] sm:$0xff]
    %v701 = vld [vmem:[%s686 + $0x70] sm:$0xff]
    %v702 = vld [vmem:[%s686 + $0x78] sm:$0xff]
    %v703 = vld [vmem:[%s686 + $0x80] sm:$0xff]
    %v704 = vld [vmem:[%s686 + $0x88] sm:$0xff]
    %v705 = vld [vmem:[%s686 + $0x90] sm:$0xff]
    %v706 = vld [vmem:[%s686 + $0x98] sm:$0xff]
    %v707 = vld [vmem:[%s686 + $0xa0] sm:$0xff]
    %v708 = vld [vmem:[%s686 + $0xa8] sm:$0xff]
    %v709 = vld [vmem:[%s686 + $0xb0] sm:$0xff]
    %v710 = vld [vmem:[%s686 + $0xb8] sm:$0xff]
    %v711 = vld [vmem:[%s686 + $0xc0] sm:$0xff]
    %v712 = vld [vmem:[%s686 + $0xc8] sm:$0xff]
    %v713 = vld [vmem:[%s686 + $0xd0] sm:$0xff]
    %v714 = vld [vmem:[%s686 + $0xd8] sm:$0xff]
    %v715 = vld [vmem:[%s686 + $0xe0] sm:$0xff]
    %v716 = vld [vmem:[%s686 + $0xe8] sm:$0xff]
    %v717 = vld [vmem:[%s686 + $0xf0] sm:$0xff]
    %v718 = vld [vmem:[%s686 + $0xf8] sm:$0xff]
    %719 = vmatprep.subr.mxu0 0.0
    %720 = vmatpush1.msra.mxu0 %v702
    %721 = vmatprep.subr.mxu0 0.0
    %722 = vmatpush1.msra.mxu0 %v701
    %723 = vmatprep.subr.mxu0 0.0
    %724 = vmatpush1.msra.mxu0 %v700
    %725 = vmatprep.subr.mxu0 0.0
    %726 = vmatpush1.msra.mxu0 %v699
    %727 = vmatprep.subr.mxu0 0.0
    %728 = vmatpush1.msra.mxu0 %v698
    %729 = vmatprep.subr.mxu0 0.0
    %730 = vmatpush1.msra.mxu0 %v697
    %731 = vmatprep.subr.mxu0 0.0
    %732 = vmatpush1.msra.mxu0 %v696
    %733 = vmatprep.subr.mxu0 0.0
    %734 = vmatpush1.msra.mxu0 %v695
    %735 = vmatprep.subr.mxu0 0.0
    %736 = vmatpush1.msra.mxu0 %v694
    %737 = vmatprep.subr.mxu0 0.0
    %738 = vmatpush1.msra.mxu0 %v693
    %739 = vmatprep.subr.mxu0 0.0
    %740 = vmatpush1.msra.mxu0 %v692
    %741 = vmatprep.subr.mxu0 0.0
    %742 = vmatpush1.msra.mxu0 %v691
    %743 = vmatprep.subr.mxu0 0.0
    %744 = vmatpush1.msra.mxu0 %v690
    %745 = vmatprep.subr.mxu0 0.0
    %746 = vmatpush1.msra.mxu0 %v689
    %747 = vmatprep.subr.mxu0 0.0
    %748 = vmatpush1.msra.mxu0 %v688
    %749 = vmatprep.subr.mxu0 0.0
    %750 = vmatpush1.msra.mxu0 %v687
    %751 = vmatprep.subr.mxu0 0.0
    %752 = vmatpush2.msra.mxu0 %v718
    %753 = vmatprep.subr.mxu0 0.0
    %754 = vmatpush2.msra.mxu0 %v717
    %755 = vmatprep.subr.mxu0 0.0
    %756 = vmatpush2.msra.mxu0 %v716
    %757 = vmatprep.subr.mxu0 0.0
    %758 = vmatpush2.msra.mxu0 %v715
    %759 = vmatprep.subr.mxu0 0.0
    %760 = vmatpush2.msra.mxu0 %v714
    %761 = vmatprep.subr.mxu0 0.0
    %762 = vmatpush2.msra.mxu0 %v713
    %763 = vmatprep.subr.mxu0 0.0
    %764 = vmatpush2.msra.mxu0 %v712
    %765 = vmatprep.subr.mxu0 0.0
    %766 = vmatpush2.msra.mxu0 %v711
    %767 = vmatprep.subr.mxu0 0.0
    %768 = vmatpush2.msra.mxu0 %v710
    %769 = vmatprep.subr.mxu0 0.0
    %770 = vmatpush2.msra.mxu0 %v709
    %771 = vmatprep.subr.mxu0 0.0
    %772 = vmatpush2.msra.mxu0 %v708
    %773 = vmatprep.subr.mxu0 0.0
    %774 = vmatpush2.msra.mxu0 %v707
    %775 = vmatprep.subr.mxu0 0.0
    %776 = vmatpush2.msra.mxu0 %v706
    %777 = vmatprep.subr.mxu0 0.0
    %778 = vmatpush2.msra.mxu0 %v705
    %779 = vmatprep.subr.mxu0 0.0
    %780 = vmatpush2.msra.mxu0 %v704
    %781 = vmatprep.subr.mxu0 0.0
    %782 = vmatpush2.msra.mxu0 %v703
    %783 = vmatprep.mubr.f32.mxu0 %v683
    %784 = vmatmul.mubr.f32.gmra.mxu0 %v682
    %v785 = vpop.f32.mrf.mxu0
    %v786 = vadd.f32 0.0, %v785
    %v787 = vpop.f32.mrf.mxu0
    %788 = vmatprep.mubr.f32.mxu0 %v685
    %789 = vmatmul.mubr.f32.gmra.mxu0 %v684
    %v790 = vpop.f32.mrf.mxu0
    %v791 = vadd.f32 0.0, %v790
    %v792 = vpop.f32.mrf.mxu0
    %793 = vdwg.mxu0
    %s794 = sld [smem:[#allocation2 + $0x1]]
    %v795 = vstv %s794
    %v796 = vmul.f32 %v795, %v786
    %v797 = vmul.f32 %v795, %v791
    %v798 = vadd.f32 %v433, %v796
    %v799 = vadd.f32 %v434, %v797
    %s800 = scalar_lea.vmem [#allocation7], 1024
    %v801 = vld [vmem:[%s800] sm:$0xff]
    %v802 = vld [vmem:[%s800 + $0x8] sm:$0xff]
    %v803 = vld [vmem:[%s800 + $0x10] sm:$0xff]
    %v804 = vld [vmem:[%s800 + $0x18] sm:$0xff]
    %v805 = vld [vmem:[%s800 + $0x20] sm:$0xff]
    %v806 = vld [vmem:[%s800 + $0x28] sm:$0xff]
    %v807 = vld [vmem:[%s800 + $0x30] sm:$0xff]
    %v808 = vld [vmem:[%s800 + $0x38] sm:$0xff]
    %v809 = vld [vmem:[%s800 + $0x40] sm:$0xff]
    %v810 = vld [vmem:[%s800 + $0x48] sm:$0xff]
    %v811 = vld [vmem:[%s800 + $0x50] sm:$0xff]
    %v812 = vld [vmem:[%s800 + $0x58] sm:$0xff]
    %v813 = vld [vmem:[%s800 + $0x60] sm:$0xff]
    %v814 = vld [vmem:[%s800 + $0x68] sm:$0xff]
    %v815 = vld [vmem:[%s800 + $0x70] sm:$0xff]
    %v816 = vld [vmem:[%s800 + $0x78] sm:$0xff]
    %v817 = vld [vmem:[%s800 + $0x80] sm:$0xff]
    %v818 = vld [vmem:[%s800 + $0x88] sm:$0xff]
    %v819 = vld [vmem:[%s800 + $0x90] sm:$0xff]
    %v820 = vld [vmem:[%s800 + $0x98] sm:$0xff]
    %v821 = vld [vmem:[%s800 + $0xa0] sm:$0xff]
    %v822 = vld [vmem:[%s800 + $0xa8] sm:$0xff]
    %v823 = vld [vmem:[%s800 + $0xb0] sm:$0xff]
    %v824 = vld [vmem:[%s800 + $0xb8] sm:$0xff]
    %v825 = vld [vmem:[%s800 + $0xc0] sm:$0xff]
    %v826 = vld [vmem:[%s800 + $0xc8] sm:$0xff]
    %v827 = vld [vmem:[%s800 + $0xd0] sm:$0xff]
    %v828 = vld [vmem:[%s800 + $0xd8] sm:$0xff]
    %v829 = vld [vmem:[%s800 + $0xe0] sm:$0xff]
    %v830 = vld [vmem:[%s800 + $0xe8] sm:$0xff]
    %v831 = vld [vmem:[%s800 + $0xf0] sm:$0xff]
    %v832 = vld [vmem:[%s800 + $0xf8] sm:$0xff]
    %v833 = vld [vmem:[%s800 + $0x100] sm:$0xff]
    %v834 = vld [vmem:[%s800 + $0x108] sm:$0xff]
    %v835 = vld [vmem:[%s800 + $0x110] sm:$0xff]
    %v836 = vld [vmem:[%s800 + $0x118] sm:$0xff]
    %v837 = vld [vmem:[%s800 + $0x120] sm:$0xff]
    %v838 = vld [vmem:[%s800 + $0x128] sm:$0xff]
    %v839 = vld [vmem:[%s800 + $0x130] sm:$0xff]
    %v840 = vld [vmem:[%s800 + $0x138] sm:$0xff]
    %v841 = vld [vmem:[%s800 + $0x140] sm:$0xff]
    %v842 = vld [vmem:[%s800 + $0x148] sm:$0xff]
    %v843 = vld [vmem:[%s800 + $0x150] sm:$0xff]
    %v844 = vld [vmem:[%s800 + $0x158] sm:$0xff]
    %v845 = vld [vmem:[%s800 + $0x160] sm:$0xff]
    %v846 = vld [vmem:[%s800 + $0x168] sm:$0xff]
    %v847 = vld [vmem:[%s800 + $0x170] sm:$0xff]
    %v848 = vld [vmem:[%s800 + $0x178] sm:$0xff]
    %v849 = vld [vmem:[%s800 + $0x180] sm:$0xff]
    %v850 = vld [vmem:[%s800 + $0x188] sm:$0xff]
    %v851 = vld [vmem:[%s800 + $0x190] sm:$0xff]
    %v852 = vld [vmem:[%s800 + $0x198] sm:$0xff]
    %v853 = vld [vmem:[%s800 + $0x1a0] sm:$0xff]
    %v854 = vld [vmem:[%s800 + $0x1a8] sm:$0xff]
    %v855 = vld [vmem:[%s800 + $0x1b0] sm:$0xff]
    %v856 = vld [vmem:[%s800 + $0x1b8] sm:$0xff]
    %v857 = vld [vmem:[%s800 + $0x1c0] sm:$0xff]
    %v858 = vld [vmem:[%s800 + $0x1c8] sm:$0xff]
    %v859 = vld [vmem:[%s800 + $0x1d0] sm:$0xff]
    %v860 = vld [vmem:[%s800 + $0x1d8] sm:$0xff]
    %v861 = vld [vmem:[%s800 + $0x1e0] sm:$0xff]
    %v862 = vld [vmem:[%s800 + $0x1e8] sm:$0xff]
    %v863 = vld [vmem:[%s800 + $0x1f0] sm:$0xff]
    %v864 = vld [vmem:[%s800 + $0x1f8] sm:$0xff]
    %865 = vmatprep.subr.mxu0 %v862
    %866 = vmatpush1.msra.mxu0 %v861
    %867 = vmatprep.subr.mxu0 %v858
    %868 = vmatpush1.msra.mxu0 %v857
    %869 = vmatprep.subr.mxu0 %v854
    %870 = vmatpush1.msra.mxu0 %v853
    %871 = vmatprep.subr.mxu0 %v850
    %872 = vmatpush1.msra.mxu0 %v849
    %873 = vmatprep.subr.mxu0 %v846
    %874 = vmatpush1.msra.mxu0 %v845
    %875 = vmatprep.subr.mxu0 %v842
    %876 = vmatpush1.msra.mxu0 %v841
    %877 = vmatprep.subr.mxu0 %v838
    %878 = vmatpush1.msra.mxu0 %v837
    %879 = vmatprep.subr.mxu0 %v834
    %880 = vmatpush1.msra.mxu0 %v833
    %881 = vmatprep.subr.mxu0 %v830
    %882 = vmatpush1.msra.mxu0 %v829
    %883 = vmatprep.subr.mxu0 %v826
    %884 = vmatpush1.msra.mxu0 %v825
    %885 = vmatprep.subr.mxu0 %v822
    %886 = vmatpush1.msra.mxu0 %v821
    %887 = vmatprep.subr.mxu0 %v818
    %888 = vmatpush1.msra.mxu0 %v817
    %889 = vmatprep.subr.mxu0 %v814
    %890 = vmatpush1.msra.mxu0 %v813
    %891 = vmatprep.subr.mxu0 %v810
    %892 = vmatpush1.msra.mxu0 %v809
    %893 = vmatprep.subr.mxu0 %v806
    %894 = vmatpush1.msra.mxu0 %v805
    %895 = vmatprep.subr.mxu0 %v802
    %896 = vmatpush1.msra.mxu0 %v801
    %897 = vmatprep.subr.mxu0 0.0
    %898 = vmatpush2.msra.mxu0 0.0
    %899 = vmatprep.subr.mxu0 0.0
    %900 = vmatpush2.msra.mxu0 0.0
    %901 = vmatprep.subr.mxu0 0.0
    %902 = vmatpush2.msra.mxu0 0.0
    %903 = vmatprep.subr.mxu0 0.0
    %904 = vmatpush2.msra.mxu0 0.0
    %905 = vmatprep.subr.mxu0 0.0
    %906 = vmatpush2.msra.mxu0 0.0
    %907 = vmatprep.subr.mxu0 0.0
    %908 = vmatpush2.msra.mxu0 0.0
    %909 = vmatprep.subr.mxu0 0.0
    %910 = vmatpush2.msra.mxu0 0.0
    %911 = vmatprep.subr.mxu0 0.0
    %912 = vmatpush2.msra.mxu0 0.0
    %913 = vmatprep.subr.mxu0 0.0
    %914 = vmatpush2.msra.mxu0 0.0
    %915 = vmatprep.subr.mxu0 0.0
    %916 = vmatpush2.msra.mxu0 0.0
    %917 = vmatprep.subr.mxu0 0.0
    %918 = vmatpush2.msra.mxu0 0.0
    %919 = vmatprep.subr.mxu0 0.0
    %920 = vmatpush2.msra.mxu0 0.0
    %921 = vmatprep.subr.mxu0 0.0
    %922 = vmatpush2.msra.mxu0 0.0
    %923 = vmatprep.subr.mxu0 0.0
    %924 = vmatpush2.msra.mxu0 0.0
    %925 = vmatprep.subr.mxu0 0.0
    %926 = vmatpush2.msra.mxu0 0.0
    %927 = vmatprep.subr.mxu0 0.0
    %928 = vmatpush2.msra.mxu0 0.0
    %929 = vmatprep.mubr.f32.mxu0 0.0
    %930 = vmatmul.mubr.f32.gmra.mxu0 %v70
    %v931 = vpop.f32.mrf.mxu0
    %v932 = vadd.f32 0.0, %v931
    %v933 = vpop.f32.mrf.mxu0
    %v934 = vadd.f32 0.0, %v933
    %935 = vmatprep.mubr.f32.mxu0 0.0
    %936 = vmatmul.mubr.f32.gmra.mxu0 %v71
    %v937 = vpop.f32.mrf.mxu0
    %v938 = vadd.f32 0.0, %v937
    %v939 = vpop.f32.mrf.mxu0
    %v940 = vadd.f32 0.0, %v939
    %941 = vdwg.mxu0
    %942 = vmatprep.subr.mxu0 %v864
    %943 = vmatpush1.msra.mxu0 %v863
    %944 = vmatprep.subr.mxu0 %v860
    %945 = vmatpush1.msra.mxu0 %v859
    %946 = vmatprep.subr.mxu0 %v856
    %947 = vmatpush1.msra.mxu0 %v855
    %948 = vmatprep.subr.mxu0 %v852
    %949 = vmatpush1.msra.mxu0 %v851
    %950 = vmatprep.subr.mxu0 %v848
    %951 = vmatpush1.msra.mxu0 %v847
    %952 = vmatprep.subr.mxu0 %v844
    %953 = vmatpush1.msra.mxu0 %v843
    %954 = vmatprep.subr.mxu0 %v840
    %955 = vmatpush1.msra.mxu0 %v839
    %956 = vmatprep.subr.mxu0 %v836
    %957 = vmatpush1.msra.mxu0 %v835
    %958 = vmatprep.subr.mxu0 %v832
    %959 = vmatpush1.msra.mxu0 %v831
    %960 = vmatprep.subr.mxu0 %v828
    %961 = vmatpush1.msra.mxu0 %v827
    %962 = vmatprep.subr.mxu0 %v824
    %963 = vmatpush1.msra.mxu0 %v823
    %964 = vmatprep.subr.mxu0 %v820
    %965 = vmatpush1.msra.mxu0 %v819
    %966 = vmatprep.subr.mxu0 %v816
    %967 = vmatpush1.msra.mxu0 %v815
    %968 = vmatprep.subr.mxu0 %v812
    %969 = vmatpush1.msra.mxu0 %v811
    %970 = vmatprep.subr.mxu0 %v808
    %971 = vmatpush1.msra.mxu0 %v807
    %972 = vmatprep.subr.mxu0 %v804
    %973 = vmatpush1.msra.mxu0 %v803
    %974 = vmatprep.subr.mxu0 0.0
    %975 = vmatpush2.msra.mxu0 0.0
    %976 = vmatprep.subr.mxu0 0.0
    %977 = vmatpush2.msra.mxu0 0.0
    %978 = vmatprep.subr.mxu0 0.0
    %979 = vmatpush2.msra.mxu0 0.0
    %980 = vmatprep.subr.mxu0 0.0
    %981 = vmatpush2.msra.mxu0 0.0
    %982 = vmatprep.subr.mxu0 0.0
    %983 = vmatpush2.msra.mxu0 0.0
    %984 = vmatprep.subr.mxu0 0.0
    %985 = vmatpush2.msra.mxu0 0.0
    %986 = vmatprep.subr.mxu0 0.0
    %987 = vmatpush2.msra.mxu0 0.0
    %988 = vmatprep.subr.mxu0 0.0
    %989 = vmatpush2.msra.mxu0 0.0
    %990 = vmatprep.subr.mxu0 0.0
    %991 = vmatpush2.msra.mxu0 0.0
    %992 = vmatprep.subr.mxu0 0.0
    %993 = vmatpush2.msra.mxu0 0.0
    %994 = vmatprep.subr.mxu0 0.0
    %995 = vmatpush2.msra.mxu0 0.0
    %996 = vmatprep.subr.mxu0 0.0
    %997 = vmatpush2.msra.mxu0 0.0
    %998 = vmatprep.subr.mxu0 0.0
    %999 = vmatpush2.msra.mxu0 0.0
    %1000 = vmatprep.subr.mxu0 0.0
    %1001 = vmatpush2.msra.mxu0 0.0
    %1002 = vmatprep.subr.mxu0 0.0
    %1003 = vmatpush2.msra.mxu0 0.0
    %1004 = vmatprep.subr.mxu0 0.0
    %1005 = vmatpush2.msra.mxu0 0.0
    %1006 = vmatprep.mubr.f32.mxu0 0.0
    %1007 = vmatmul.mubr.f32.gmra.mxu0 %v70
    %v1008 = vpop.f32.mrf.mxu0
    %v1009 = vadd.f32 0.0, %v1008
    %v1010 = vpop.f32.mrf.mxu0
    %v1011 = vadd.f32 0.0, %v1010
    %1012 = vmatprep.mubr.f32.mxu0 0.0
    %1013 = vmatmul.mubr.f32.gmra.mxu0 %v71
    %v1014 = vpop.f32.mrf.mxu0
    %v1015 = vadd.f32 0.0, %v1014
    %v1016 = vpop.f32.mrf.mxu0
    %v1017 = vadd.f32 0.0, %v1016
    %1018 = vdwg.mxu0
    %v1019 = vxor.u32 %v932, 2147483648
    %v1020 = vxor.u32 %v934, 2147483648
    %v1021 = vxor.u32 %v938, 2147483648
    %v1022 = vxor.u32 %v940, 2147483648
    %v1023 = vmul.f32 %v1019, 1.442695
    %v1024 = vpow.pop %v1023
    %v1025 = vmul.f32 %v1020, 1.442695
    %v1026 = vpow.pop %v1025
    %v1027 = vmul.f32 %v1021, 1.442695
    %v1028 = vpow.pop %v1027
    %v1029 = vmul.f32 %v1022, 1.442695
    %v1030 = vpow.pop %v1029
    %v1031 = vadd.f32 %v1024, 1.0
    %v1032 = vadd.f32 %v1026, 1.0
    %v1033 = vadd.f32 %v1028, 1.0
    %v1034 = vadd.f32 %v1030, 1.0
    %v1035 = vrcp.pop %v1031
    %v1036 = vmul.f32 1.0, %v1035
    %v1037 = vrcp.pop %v1032
    %v1038 = vmul.f32 1.0, %v1037
    %v1039 = vrcp.pop %v1033
    %v1040 = vmul.f32 1.0, %v1039
    %v1041 = vrcp.pop %v1034
    %v1042 = vmul.f32 1.0, %v1041
    %v1043 = vmul.f32 %v932, %v1036
    %v1044 = vmul.f32 %v934, %v1038
    %v1045 = vmul.f32 %v938, %v1040
    %v1046 = vmul.f32 %v940, %v1042
    %v1047 = vmul.f32 %v1043, %v1009
    %v1048 = vmul.f32 %v1044, %v1011
    %v1049 = vmul.f32 %v1045, %v1015
    %v1050 = vmul.f32 %v1046, %v1017
    %s1051 = scalar_lea.vmem [#allocation9], 512
    %v1052 = vld [vmem:[%s1051] sm:$0xff]
    %v1053 = vld [vmem:[%s1051 + $0x8] sm:$0xff]
    %v1054 = vld [vmem:[%s1051 + $0x10] sm:$0xff]
    %v1055 = vld [vmem:[%s1051 + $0x18] sm:$0xff]
    %v1056 = vld [vmem:[%s1051 + $0x20] sm:$0xff]
    %v1057 = vld [vmem:[%s1051 + $0x28] sm:$0xff]
    %v1058 = vld [vmem:[%s1051 + $0x30] sm:$0xff]
    %v1059 = vld [vmem:[%s1051 + $0x38] sm:$0xff]
    %v1060 = vld [vmem:[%s1051 + $0x40] sm:$0xff]
    %v1061 = vld [vmem:[%s1051 + $0x48] sm:$0xff]
    %v1062 = vld [vmem:[%s1051 + $0x50] sm:$0xff]
    %v1063 = vld [vmem:[%s1051 + $0x58] sm:$0xff]
    %v1064 = vld [vmem:[%s1051 + $0x60] sm:$0xff]
    %v1065 = vld [vmem:[%s1051 + $0x68] sm:$0xff]
    %v1066 = vld [vmem:[%s1051 + $0x70] sm:$0xff]
    %v1067 = vld [vmem:[%s1051 + $0x78] sm:$0xff]
    %v1068 = vld [vmem:[%s1051 + $0x80] sm:$0xff]
    %v1069 = vld [vmem:[%s1051 + $0x88] sm:$0xff]
    %v1070 = vld [vmem:[%s1051 + $0x90] sm:$0xff]
    %v1071 = vld [vmem:[%s1051 + $0x98] sm:$0xff]
    %v1072 = vld [vmem:[%s1051 + $0xa0] sm:$0xff]
    %v1073 = vld [vmem:[%s1051 + $0xa8] sm:$0xff]
    %v1074 = vld [vmem:[%s1051 + $0xb0] sm:$0xff]
    %v1075 = vld [vmem:[%s1051 + $0xb8] sm:$0xff]
    %v1076 = vld [vmem:[%s1051 + $0xc0] sm:$0xff]
    %v1077 = vld [vmem:[%s1051 + $0xc8] sm:$0xff]
    %v1078 = vld [vmem:[%s1051 + $0xd0] sm:$0xff]
    %v1079 = vld [vmem:[%s1051 + $0xd8] sm:$0xff]
    %v1080 = vld [vmem:[%s1051 + $0xe0] sm:$0xff]
    %v1081 = vld [vmem:[%s1051 + $0xe8] sm:$0xff]
    %v1082 = vld [vmem:[%s1051 + $0xf0] sm:$0xff]
    %v1083 = vld [vmem:[%s1051 + $0xf8] sm:$0xff]
    %1084 = vmatprep.subr.mxu0 0.0
    %1085 = vmatpush1.msra.mxu0 %v1067
    %1086 = vmatprep.subr.mxu0 0.0
    %1087 = vmatpush1.msra.mxu0 %v1066
    %1088 = vmatprep.subr.mxu0 0.0
    %1089 = vmatpush1.msra.mxu0 %v1065
    %1090 = vmatprep.subr.mxu0 0.0
    %1091 = vmatpush1.msra.mxu0 %v1064
    %1092 = vmatprep.subr.mxu0 0.0
    %1093 = vmatpush1.msra.mxu0 %v1063
    %1094 = vmatprep.subr.mxu0 0.0
    %1095 = vmatpush1.msra.mxu0 %v1062
    %1096 = vmatprep.subr.mxu0 0.0
    %1097 = vmatpush1.msra.mxu0 %v1061
    %1098 = vmatprep.subr.mxu0 0.0
    %1099 = vmatpush1.msra.mxu0 %v1060
    %1100 = vmatprep.subr.mxu0 0.0
    %1101 = vmatpush1.msra.mxu0 %v1059
    %1102 = vmatprep.subr.mxu0 0.0
    %1103 = vmatpush1.msra.mxu0 %v1058
    %1104 = vmatprep.subr.mxu0 0.0
    %1105 = vmatpush1.msra.mxu0 %v1057
    %1106 = vmatprep.subr.mxu0 0.0
    %1107 = vmatpush1.msra.mxu0 %v1056
    %1108 = vmatprep.subr.mxu0 0.0
    %1109 = vmatpush1.msra.mxu0 %v1055
    %1110 = vmatprep.subr.mxu0 0.0
    %1111 = vmatpush1.msra.mxu0 %v1054
    %1112 = vmatprep.subr.mxu0 0.0
    %1113 = vmatpush1.msra.mxu0 %v1053
    %1114 = vmatprep.subr.mxu0 0.0
    %1115 = vmatpush1.msra.mxu0 %v1052
    %1116 = vmatprep.subr.mxu0 0.0
    %1117 = vmatpush2.msra.mxu0 %v1083
    %1118 = vmatprep.subr.mxu0 0.0
    %1119 = vmatpush2.msra.mxu0 %v1082
    %1120 = vmatprep.subr.mxu0 0.0
    %1121 = vmatpush2.msra.mxu0 %v1081
    %1122 = vmatprep.subr.mxu0 0.0
    %1123 = vmatpush2.msra.mxu0 %v1080
    %1124 = vmatprep.subr.mxu0 0.0
    %1125 = vmatpush2.msra.mxu0 %v1079
    %1126 = vmatprep.subr.mxu0 0.0
    %1127 = vmatpush2.msra.mxu0 %v1078
    %1128 = vmatprep.subr.mxu0 0.0
    %1129 = vmatpush2.msra.mxu0 %v1077
    %1130 = vmatprep.subr.mxu0 0.0
    %1131 = vmatpush2.msra.mxu0 %v1076
    %1132 = vmatprep.subr.mxu0 0.0
    %1133 = vmatpush2.msra.mxu0 %v1075
    %1134 = vmatprep.subr.mxu0 0.0
    %1135 = vmatpush2.msra.mxu0 %v1074
    %1136 = vmatprep.subr.mxu0 0.0
    %1137 = vmatpush2.msra.mxu0 %v1073
    %1138 = vmatprep.subr.mxu0 0.0
    %1139 = vmatpush2.msra.mxu0 %v1072
    %1140 = vmatprep.subr.mxu0 0.0
    %1141 = vmatpush2.msra.mxu0 %v1071
    %1142 = vmatprep.subr.mxu0 0.0
    %1143 = vmatpush2.msra.mxu0 %v1070
    %1144 = vmatprep.subr.mxu0 0.0
    %1145 = vmatpush2.msra.mxu0 %v1069
    %1146 = vmatprep.subr.mxu0 0.0
    %1147 = vmatpush2.msra.mxu0 %v1068
    %1148 = vmatprep.mubr.f32.mxu0 %v1048
    %1149 = vmatmul.mubr.f32.gmra.mxu0 %v1047
    %v1150 = vpop.f32.mrf.mxu0
    %v1151 = vadd.f32 0.0, %v1150
    %v1152 = vpop.f32.mrf.mxu0
    %1153 = vmatprep.mubr.f32.mxu0 %v1050
    %1154 = vmatmul.mubr.f32.gmra.mxu0 %v1049
    %v1155 = vpop.f32.mrf.mxu0
    %v1156 = vadd.f32 0.0, %v1155
    %v1157 = vpop.f32.mrf.mxu0
    %1158 = vdwg.mxu0
    %s1159 = sld [smem:[#allocation2 + $0x2]]
    %v1160 = vstv %s1159
    %v1161 = vmul.f32 %v1160, %v1151
    %v1162 = vmul.f32 %v1160, %v1156
    %v1163 = vadd.f32 %v798, %v1161
    %v1164 = vadd.f32 %v799, %v1162
    %s1165 = scalar_lea.vmem [#allocation7], 1536
    %v1166 = vld [vmem:[%s1165] sm:$0xff]
    %v1167 = vld [vmem:[%s1165 + $0x8] sm:$0xff]
    %v1168 = vld [vmem:[%s1165 + $0x10] sm:$0xff]
    %v1169 = vld [vmem:[%s1165 + $0x18] sm:$0xff]
    %v1170 = vld [vmem:[%s1165 + $0x20] sm:$0xff]
    %v1171 = vld [vmem:[%s1165 + $0x28] sm:$0xff]
    %v1172 = vld [vmem:[%s1165 + $0x30] sm:$0xff]
    %v1173 = vld [vmem:[%s1165 + $0x38] sm:$0xff]
    %v1174 = vld [vmem:[%s1165 + $0x40] sm:$0xff]
    %v1175 = vld [vmem:[%s1165 + $0x48] sm:$0xff]
    %v1176 = vld [vmem:[%s1165 + $0x50] sm:$0xff]
    %v1177 = vld [vmem:[%s1165 + $0x58] sm:$0xff]
    %v1178 = vld [vmem:[%s1165 + $0x60] sm:$0xff]
    %v1179 = vld [vmem:[%s1165 + $0x68] sm:$0xff]
    %v1180 = vld [vmem:[%s1165 + $0x70] sm:$0xff]
    %v1181 = vld [vmem:[%s1165 + $0x78] sm:$0xff]
    %v1182 = vld [vmem:[%s1165 + $0x80] sm:$0xff]
    %v1183 = vld [vmem:[%s1165 + $0x88] sm:$0xff]
    %v1184 = vld [vmem:[%s1165 + $0x90] sm:$0xff]
    %v1185 = vld [vmem:[%s1165 + $0x98] sm:$0xff]
    %v1186 = vld [vmem:[%s1165 + $0xa0] sm:$0xff]
    %v1187 = vld [vmem:[%s1165 + $0xa8] sm:$0xff]
    %v1188 = vld [vmem:[%s1165 + $0xb0] sm:$0xff]
    %v1189 = vld [vmem:[%s1165 + $0xb8] sm:$0xff]
    %v1190 = vld [vmem:[%s1165 + $0xc0] sm:$0xff]
    %v1191 = vld [vmem:[%s1165 + $0xc8] sm:$0xff]
    %v1192 = vld [vmem:[%s1165 + $0xd0] sm:$0xff]
    %v1193 = vld [vmem:[%s1165 + $0xd8] sm:$0xff]
    %v1194 = vld [vmem:[%s1165 + $0xe0] sm:$0xff]
    %v1195 = vld [vmem:[%s1165 + $0xe8] sm:$0xff]
    %v1196 = vld [vmem:[%s1165 + $0xf0] sm:$0xff]
    %v1197 = vld [vmem:[%s1165 + $0xf8] sm:$0xff]
    %v1198 = vld [vmem:[%s1165 + $0x100] sm:$0xff]
    %v1199 = vld [vmem:[%s1165 + $0x108] sm:$0xff]
    %v1200 = vld [vmem:[%s1165 + $0x110] sm:$0xff]
    %v1201 = vld [vmem:[%s1165 + $0x118] sm:$0xff]
    %v1202 = vld [vmem:[%s1165 + $0x120] sm:$0xff]
    %v1203 = vld [vmem:[%s1165 + $0x128] sm:$0xff]
    %v1204 = vld [vmem:[%s1165 + $0x130] sm:$0xff]
    %v1205 = vld [vmem:[%s1165 + $0x138] sm:$0xff]
    %v1206 = vld [vmem:[%s1165 + $0x140] sm:$0xff]
    %v1207 = vld [vmem:[%s1165 + $0x148] sm:$0xff]
    %v1208 = vld [vmem:[%s1165 + $0x150] sm:$0xff]
    %v1209 = vld [vmem:[%s1165 + $0x158] sm:$0xff]
    %v1210 = vld [vmem:[%s1165 + $0x160] sm:$0xff]
    %v1211 = vld [vmem:[%s1165 + $0x168] sm:$0xff]
    %v1212 = vld [vmem:[%s1165 + $0x170] sm:$0xff]
    %v1213 = vld [vmem:[%s1165 + $0x178] sm:$0xff]
    %v1214 = vld [vmem:[%s1165 + $0x180] sm:$0xff]
    %v1215 = vld [vmem:[%s1165 + $0x188] sm:$0xff]
    %v1216 = vld [vmem:[%s1165 + $0x190] sm:$0xff]
    %v1217 = vld [vmem:[%s1165 + $0x198] sm:$0xff]
    %v1218 = vld [vmem:[%s1165 + $0x1a0] sm:$0xff]
    %v1219 = vld [vmem:[%s1165 + $0x1a8] sm:$0xff]
    %v1220 = vld [vmem:[%s1165 + $0x1b0] sm:$0xff]
    %v1221 = vld [vmem:[%s1165 + $0x1b8] sm:$0xff]
    %v1222 = vld [vmem:[%s1165 + $0x1c0] sm:$0xff]
    %v1223 = vld [vmem:[%s1165 + $0x1c8] sm:$0xff]
    %v1224 = vld [vmem:[%s1165 + $0x1d0] sm:$0xff]
    %v1225 = vld [vmem:[%s1165 + $0x1d8] sm:$0xff]
    %v1226 = vld [vmem:[%s1165 + $0x1e0] sm:$0xff]
    %v1227 = vld [vmem:[%s1165 + $0x1e8] sm:$0xff]
    %v1228 = vld [vmem:[%s1165 + $0x1f0] sm:$0xff]
    %v1229 = vld [vmem:[%s1165 + $0x1f8] sm:$0xff]
    %1230 = vmatprep.subr.mxu0 %v1227
    %1231 = vmatpush1.msra.mxu0 %v1226
    %1232 = vmatprep.subr.mxu0 %v1223
    %1233 = vmatpush1.msra.mxu0 %v1222
    %1234 = vmatprep.subr.mxu0 %v1219
    %1235 = vmatpush1.msra.mxu0 %v1218
    %1236 = vmatprep.subr.mxu0 %v1215
    %1237 = vmatpush1.msra.mxu0 %v1214
    %1238 = vmatprep.subr.mxu0 %v1211
    %1239 = vmatpush1.msra.mxu0 %v1210
    %1240 = vmatprep.subr.mxu0 %v1207
    %1241 = vmatpush1.msra.mxu0 %v1206
    %1242 = vmatprep.subr.mxu0 %v1203
    %1243 = vmatpush1.msra.mxu0 %v1202
    %1244 = vmatprep.subr.mxu0 %v1199
    %1245 = vmatpush1.msra.mxu0 %v1198
    %1246 = vmatprep.subr.mxu0 %v1195
    %1247 = vmatpush1.msra.mxu0 %v1194
    %1248 = vmatprep.subr.mxu0 %v1191
    %1249 = vmatpush1.msra.mxu0 %v1190
    %1250 = vmatprep.subr.mxu0 %v1187
    %1251 = vmatpush1.msra.mxu0 %v1186
    %1252 = vmatprep.subr.mxu0 %v1183
    %1253 = vmatpush1.msra.mxu0 %v1182
    %1254 = vmatprep.subr.mxu0 %v1179
    %1255 = vmatpush1.msra.mxu0 %v1178
    %1256 = vmatprep.subr.mxu0 %v1175
    %1257 = vmatpush1.msra.mxu0 %v1174
    %1258 = vmatprep.subr.mxu0 %v1171
    %1259 = vmatpush1.msra.mxu0 %v1170
    %1260 = vmatprep.subr.mxu0 %v1167
    %1261 = vmatpush1.msra.mxu0 %v1166
    %1262 = vmatprep.subr.mxu0 0.0
    %1263 = vmatpush2.msra.mxu0 0.0
    %1264 = vmatprep.subr.mxu0 0.0
    %1265 = vmatpush2.msra.mxu0 0.0
    %1266 = vmatprep.subr.mxu0 0.0
    %1267 = vmatpush2.msra.mxu0 0.0
    %1268 = vmatprep.subr.mxu0 0.0
    %1269 = vmatpush2.msra.mxu0 0.0
    %1270 = vmatprep.subr.mxu0 0.0
    %1271 = vmatpush2.msra.mxu0 0.0
    %1272 = vmatprep.subr.mxu0 0.0
    %1273 = vmatpush2.msra.mxu0 0.0
    %1274 = vmatprep.subr.mxu0 0.0
    %1275 = vmatpush2.msra.mxu0 0.0
    %1276 = vmatprep.subr.mxu0 0.0
    %1277 = vmatpush2.msra.mxu0 0.0
    %1278 = vmatprep.subr.mxu0 0.0
    %1279 = vmatpush2.msra.mxu0 0.0
    %1280 = vmatprep.subr.mxu0 0.0
    %1281 = vmatpush2.msra.mxu0 0.0
    %1282 = vmatprep.subr.mxu0 0.0
    %1283 = vmatpush2.msra.mxu0 0.0
    %1284 = vmatprep.subr.mxu0 0.0
    %1285 = vmatpush2.msra.mxu0 0.0
    %1286 = vmatprep.subr.mxu0 0.0
    %1287 = vmatpush2.msra.mxu0 0.0
    %1288 = vmatprep.subr.mxu0 0.0
    %1289 = vmatpush2.msra.mxu0 0.0
    %1290 = vmatprep.subr.mxu0 0.0
    %1291 = vmatpush2.msra.mxu0 0.0
    %1292 = vmatprep.subr.mxu0 0.0
    %1293 = vmatpush2.msra.mxu0 0.0
    %1294 = vmatprep.mubr.f32.mxu0 0.0
    %1295 = vmatmul.mubr.f32.gmra.mxu0 %v70
    %v1296 = vpop.f32.mrf.mxu0
    %v1297 = vadd.f32 0.0, %v1296
    %v1298 = vpop.f32.mrf.mxu0
    %v1299 = vadd.f32 0.0, %v1298
    %1300 = vmatprep.mubr.f32.mxu0 0.0
    %1301 = vmatmul.mubr.f32.gmra.mxu0 %v71
    %v1302 = vpop.f32.mrf.mxu0
    %v1303 = vadd.f32 0.0, %v1302
    %v1304 = vpop.f32.mrf.mxu0
    %v1305 = vadd.f32 0.0, %v1304
    %1306 = vdwg.mxu0
    %1307 = vmatprep.subr.mxu0 %v1229
    %1308 = vmatpush1.msra.mxu0 %v1228
    %1309 = vmatprep.subr.mxu0 %v1225
    %1310 = vmatpush1.msra.mxu0 %v1224
    %1311 = vmatprep.subr.mxu0 %v1221
    %1312 = vmatpush1.msra.mxu0 %v1220
    %1313 = vmatprep.subr.mxu0 %v1217
    %1314 = vmatpush1.msra.mxu0 %v1216
    %1315 = vmatprep.subr.mxu0 %v1213
    %1316 = vmatpush1.msra.mxu0 %v1212
    %1317 = vmatprep.subr.mxu0 %v1209
    %1318 = vmatpush1.msra.mxu0 %v1208
    %1319 = vmatprep.subr.mxu0 %v1205
    %1320 = vmatpush1.msra.mxu0 %v1204
    %1321 = vmatprep.subr.mxu0 %v1201
    %1322 = vmatpush1.msra.mxu0 %v1200
    %1323 = vmatprep.subr.mxu0 %v1197
    %1324 = vmatpush1.msra.mxu0 %v1196
    %1325 = vmatprep.subr.mxu0 %v1193
    %1326 = vmatpush1.msra.mxu0 %v1192
    %1327 = vmatprep.subr.mxu0 %v1189
    %1328 = vmatpush1.msra.mxu0 %v1188
    %1329 = vmatprep.subr.mxu0 %v1185
    %1330 = vmatpush1.msra.mxu0 %v1184
    %1331 = vmatprep.subr.mxu0 %v1181
    %1332 = vmatpush1.msra.mxu0 %v1180
    %1333 = vmatprep.subr.mxu0 %v1177
    %1334 = vmatpush1.msra.mxu0 %v1176
    %1335 = vmatprep.subr.mxu0 %v1173
    %1336 = vmatpush1.msra.mxu0 %v1172
    %1337 = vmatprep.subr.mxu0 %v1169
    %1338 = vmatpush1.msra.mxu0 %v1168
    %1339 = vmatprep.subr.mxu0 0.0
    %1340 = vmatpush2.msra.mxu0 0.0
    %1341 = vmatprep.subr.mxu0 0.0
    %1342 = vmatpush2.msra.mxu0 0.0
    %1343 = vmatprep.subr.mxu0 0.0
    %1344 = vmatpush2.msra.mxu0 0.0
    %1345 = vmatprep.subr.mxu0 0.0
    %1346 = vmatpush2.msra.mxu0 0.0
    %1347 = vmatprep.subr.mxu0 0.0
    %1348 = vmatpush2.msra.mxu0 0.0
    %1349 = vmatprep.subr.mxu0 0.0
    %1350 = vmatpush2.msra.mxu0 0.0
    %1351 = vmatprep.subr.mxu0 0.0
    %1352 = vmatpush2.msra.mxu0 0.0
    %1353 = vmatprep.subr.mxu0 0.0
    %1354 = vmatpush2.msra.mxu0 0.0
    %1355 = vmatprep.subr.mxu0 0.0
    %1356 = vmatpush2.msra.mxu0 0.0
    %1357 = vmatprep.subr.mxu0 0.0
    %1358 = vmatpush2.msra.mxu0 0.0
    %1359 = vmatprep.subr.mxu0 0.0
    %1360 = vmatpush2.msra.mxu0 0.0
    %1361 = vmatprep.subr.mxu0 0.0
    %1362 = vmatpush2.msra.mxu0 0.0
    %1363 = vmatprep.subr.mxu0 0.0
    %1364 = vmatpush2.msra.mxu0 0.0
    %1365 = vmatprep.subr.mxu0 0.0
    %1366 = vmatpush2.msra.mxu0 0.0
    %1367 = vmatprep.subr.mxu0 0.0
    %1368 = vmatpush2.msra.mxu0 0.0
    %1369 = vmatprep.subr.mxu0 0.0
    %1370 = vmatpush2.msra.mxu0 0.0
    %1371 = vmatprep.mubr.f32.mxu0 0.0
    %1372 = vmatmul.mubr.f32.gmra.mxu0 %v70
    %v1373 = vpop.f32.mrf.mxu0
    %v1374 = vadd.f32 0.0, %v1373
    %v1375 = vpop.f32.mrf.mxu0
    %v1376 = vadd.f32 0.0, %v1375
    %1377 = vmatprep.mubr.f32.mxu0 0.0
    %1378 = vmatmul.mubr.f32.gmra.mxu0 %v71
    %v1379 = vpop.f32.mrf.mxu0
    %v1380 = vadd.f32 0.0, %v1379
    %v1381 = vpop.f32.mrf.mxu0
    %v1382 = vadd.f32 0.0, %v1381
    %1383 = vdwg.mxu0
    %v1384 = vxor.u32 %v1297, 2147483648
    %v1385 = vxor.u32 %v1299, 2147483648
    %v1386 = vxor.u32 %v1303, 2147483648
    %v1387 = vxor.u32 %v1305, 2147483648
    %v1388 = vmul.f32 %v1384, 1.442695
    %v1389 = vpow.pop %v1388
    %v1390 = vmul.f32 %v1385, 1.442695
    %v1391 = vpow.pop %v1390
    %v1392 = vmul.f32 %v1386, 1.442695
    %v1393 = vpow.pop %v1392
    %v1394 = vmul.f32 %v1387, 1.442695
    %v1395 = vpow.pop %v1394
    %v1396 = vadd.f32 %v1389, 1.0
    %v1397 = vadd.f32 %v1391, 1.0
    %v1398 = vadd.f32 %v1393, 1.0
    %v1399 = vadd.f32 %v1395, 1.0
    %v1400 = vrcp.pop %v1396
    %v1401 = vmul.f32 1.0, %v1400
    %v1402 = vrcp.pop %v1397
    %v1403 = vmul.f32 1.0, %v1402
    %v1404 = vrcp.pop %v1398
    %v1405 = vmul.f32 1.0, %v1404
    %v1406 = vrcp.pop %v1399
    %v1407 = vmul.f32 1.0, %v1406
    %v1408 = vmul.f32 %v1297, %v1401
    %v1409 = vmul.f32 %v1299, %v1403
    %v1410 = vmul.f32 %v1303, %v1405
    %v1411 = vmul.f32 %v1305, %v1407
    %v1412 = vmul.f32 %v1408, %v1374
    %v1413 = vmul.f32 %v1409, %v1376
    %v1414 = vmul.f32 %v1410, %v1380
    %v1415 = vmul.f32 %v1411, %v1382
    %s1416 = scalar_lea.vmem [#allocation9], 768
    %v1417 = vld [vmem:[%s1416] sm:$0xff]
    %v1418 = vld [vmem:[%s1416 + $0x8] sm:$0xff]
    %v1419 = vld [vmem:[%s1416 + $0x10] sm:$0xff]
    %v1420 = vld [vmem:[%s1416 + $0x18] sm:$0xff]
    %v1421 = vld [vmem:[%s1416 + $0x20] sm:$0xff]
    %v1422 = vld [vmem:[%s1416 + $0x28] sm:$0xff]
    %v1423 = vld [vmem:[%s1416 + $0x30] sm:$0xff]
    %v1424 = vld [vmem:[%s1416 + $0x38] sm:$0xff]
    %v1425 = vld [vmem:[%s1416 + $0x40] sm:$0xff]
    %v1426 = vld [vmem:[%s1416 + $0x48] sm:$0xff]
    %v1427 = vld [vmem:[%s1416 + $0x50] sm:$0xff]
    %v1428 = vld [vmem:[%s1416 + $0x58] sm:$0xff]
    %v1429 = vld [vmem:[%s1416 + $0x60] sm:$0xff]
    %v1430 = vld [vmem:[%s1416 + $0x68] sm:$0xff]
    %v1431 = vld [vmem:[%s1416 + $0x70] sm:$0xff]
    %v1432 = vld [vmem:[%s1416 + $0x78] sm:$0xff]
    %v1433 = vld [vmem:[%s1416 + $0x80] sm:$0xff]
    %v1434 = vld [vmem:[%s1416 + $0x88] sm:$0xff]
    %v1435 = vld [vmem:[%s1416 + $0x90] sm:$0xff]
    %v1436 = vld [vmem:[%s1416 + $0x98] sm:$0xff]
    %v1437 = vld [vmem:[%s1416 + $0xa0] sm:$0xff]
    %v1438 = vld [vmem:[%s1416 + $0xa8] sm:$0xff]
    %v1439 = vld [vmem:[%s1416 + $0xb0] sm:$0xff]
    %v1440 = vld [vmem:[%s1416 + $0xb8] sm:$0xff]
    %v1441 = vld [vmem:[%s1416 + $0xc0] sm:$0xff]
    %v1442 = vld [vmem:[%s1416 + $0xc8] sm:$0xff]
    %v1443 = vld [vmem:[%s1416 + $0xd0] sm:$0xff]
    %v1444 = vld [vmem:[%s1416 + $0xd8] sm:$0xff]
    %v1445 = vld [vmem:[%s1416 + $0xe0] sm:$0xff]
    %v1446 = vld [vmem:[%s1416 + $0xe8] sm:$0xff]
    %v1447 = vld [vmem:[%s1416 + $0xf0] sm:$0xff]
    %v1448 = vld [vmem:[%s1416 + $0xf8] sm:$0xff]
    %1449 = vmatprep.subr.mxu0 0.0
    %1450 = vmatpush1.msra.mxu0 %v1432
    %1451 = vmatprep.subr.mxu0 0.0
    %1452 = vmatpush1.msra.mxu0 %v1431
    %1453 = vmatprep.subr.mxu0 0.0
    %1454 = vmatpush1.msra.mxu0 %v1430
    %1455 = vmatprep.subr.mxu0 0.0
    %1456 = vmatpush1.msra.mxu0 %v1429
    %1457 = vmatprep.subr.mxu0 0.0
    %1458 = vmatpush1.msra.mxu0 %v1428
    %1459 = vmatprep.subr.mxu0 0.0
    %1460 = vmatpush1.msra.mxu0 %v1427
    %1461 = vmatprep.subr.mxu0 0.0
    %1462 = vmatpush1.msra.mxu0 %v1426
    %1463 = vmatprep.subr.mxu0 0.0
    %1464 = vmatpush1.msra.mxu0 %v1425
    %1465 = vmatprep.subr.mxu0 0.0
    %1466 = vmatpush1.msra.mxu0 %v1424
    %1467 = vmatprep.subr.mxu0 0.0
    %1468 = vmatpush1.msra.mxu0 %v1423
    %1469 = vmatprep.subr.mxu0 0.0
    %1470 = vmatpush1.msra.mxu0 %v1422
    %1471 = vmatprep.subr.mxu0 0.0
    %1472 = vmatpush1.msra.mxu0 %v1421
    %1473 = vmatprep.subr.mxu0 0.0
    %1474 = vmatpush1.msra.mxu0 %v1420
    %1475 = vmatprep.subr.mxu0 0.0
    %1476 = vmatpush1.msra.mxu0 %v1419
    %1477 = vmatprep.subr.mxu0 0.0
    %1478 = vmatpush1.msra.mxu0 %v1418
    %1479 = vmatprep.subr.mxu0 0.0
    %1480 = vmatpush1.msra.mxu0 %v1417
    %1481 = vmatprep.subr.mxu0 0.0
    %1482 = vmatpush2.msra.mxu0 %v1448
    %1483 = vmatprep.subr.mxu0 0.0
    %1484 = vmatpush2.msra.mxu0 %v1447
    %1485 = vmatprep.subr.mxu0 0.0
    %1486 = vmatpush2.msra.mxu0 %v1446
    %1487 = vmatprep.subr.mxu0 0.0
    %1488 = vmatpush2.msra.mxu0 %v1445
    %1489 = vmatprep.subr.mxu0 0.0
    %1490 = vmatpush2.msra.mxu0 %v1444
    %1491 = vmatprep.subr.mxu0 0.0
    %1492 = vmatpush2.msra.mxu0 %v1443
    %1493 = vmatprep.subr.mxu0 0.0
    %1494 = vmatpush2.msra.mxu0 %v1442
    %1495 = vmatprep.subr.mxu0 0.0
    %1496 = vmatpush2.msra.mxu0 %v1441
    %1497 = vmatprep.subr.mxu0 0.0
    %1498 = vmatpush2.msra.mxu0 %v1440
    %1499 = vmatprep.subr.mxu0 0.0
    %1500 = vmatpush2.msra.mxu0 %v1439
    %1501 = vmatprep.subr.mxu0 0.0
    %1502 = vmatpush2.msra.mxu0 %v1438
    %1503 = vmatprep.subr.mxu0 0.0
    %1504 = vmatpush2.msra.mxu0 %v1437
    %1505 = vmatprep.subr.mxu0 0.0
    %1506 = vmatpush2.msra.mxu0 %v1436
    %1507 = vmatprep.subr.mxu0 0.0
    %1508 = vmatpush2.msra.mxu0 %v1435
    %1509 = vmatprep.subr.mxu0 0.0
    %1510 = vmatpush2.msra.mxu0 %v1434
    %1511 = vmatprep.subr.mxu0 0.0
    %1512 = vmatpush2.msra.mxu0 %v1433
    %1513 = vmatprep.mubr.f32.mxu0 %v1413
    %1514 = vmatmul.mubr.f32.gmra.mxu0 %v1412
    %v1515 = vpop.f32.mrf.mxu0
    %v1516 = vadd.f32 0.0, %v1515
    %v1517 = vpop.f32.mrf.mxu0
    %1518 = vmatprep.mubr.f32.mxu0 %v1415
    %1519 = vmatmul.mubr.f32.gmra.mxu0 %v1414
    %v1520 = vpop.f32.mrf.mxu0
    %v1521 = vadd.f32 0.0, %v1520
    %v1522 = vpop.f32.mrf.mxu0
    %1523 = vdwg.mxu0
    %s1524 = sld [smem:[#allocation2 + $0x3]]
    %v1525 = vstv %s1524
    %v1526 = vmul.f32 %v1525, %v1516
    %v1527 = vmul.f32 %v1525, %v1521
    %v1528 = vadd.f32 %v1163, %v1526
    %v1529 = vadd.f32 %v1164, %v1527
    %1530 = vst [vmem:[#allocation10] sm:$0xff] %v1528
    %1531 = vst [vmem:[#allocation10 + $0x8] sm:$0xff] %v1529
    // Predicated region
    $region34: #{tpu_custom_call.1} parent=1 // pred_check
      _
    $region35: #{tpu_custom_call.1} parent=1 // pred_check_branch
      %1533 = sbr.rel (0) target = $region37
    $region36: #{tpu_custom_call.1} parent=1 // pred_region
      %s1535 = ssub.s32 256, 256
      %1536 = vsyncadd [#allocation4], %s1535
      %s1537 = sshll.u32 [#allocation10], 4
      %s1538 = int_to_ptr.vmem [resolvable:$true] %s1537
      %1543 = dma.vmem_to_hbm [thread:$0]  %s1538, 256, %s4, [#allocation4], 128, 128, 8
    $region37: #{tpu_custom_call.1} parent=1 // pred_fallthru
      _
    // Predicated region
    $region38: #{tpu_custom_call.1} parent=1 // pred_check
      _
    $region39: #{tpu_custom_call.1} parent=1 // pred_check_branch
      %1545 = sbr.rel (0) target = $region41
    $region40: #{tpu_custom_call.1} parent=1 // pred_region
      %1546 = dma.done [#allocation4], 256
    $region41: #{tpu_custom_call.1} parent=1 // pred_fallthru
      _
    %1547 = vsyncpa [#allocation3], 1
    %1548 = vsyncpa [#allocation8], 1
    %1549 = vsyncpa [#allocation4], 1
    %1550 = vsyncpa [#allocation5], 1

</llo_original>
